<compile_context>
chip_gen: v5e
topology: v5e:2x2
jax: 0.10.0
libtpu: 0.0.40
codegen_flags: <defaults>
</compile_context>

<pallas_src>
import functools

import jax
import jax.numpy as jnp
from jax.experimental import pallas as pl
from jax.experimental.pallas import tpu as pltpu

EPS = 1e-5
SLOPE = 0.01  # nn.LeakyReLU default negative_slope


def _leaky(y):
    return jnp.where(y >= 0, y, SLOPE * y)


# ----------------------------- fused Pallas kernel -----------------------------

def _fused_kernel(w1_ref, p_ref, w2_ref, w3_ref, o_ref, xc_ref, col_ref, *, valid_r):
    """Single-pass fused forward.

    w1_ref : SMEM (3,)       stage-1 pointwise weights
    p_ref  : VMEM (16, Rp)   im2col'd input; rows = 16 kernel offsets (a,b,c,d),
                             lanes = flattened (n, i, j, k, l), zero-padded to Rp
    w2_ref : VMEM (6, 48)    stage-2 weights [co, ci*16+f]
    w3_ref : VMEM (48, 6)    stage-3 weights [co*16+f, ci]
    o_ref  : VMEM (48, Rp)   output [(co, f), (n, i, j, k, l)]
    xc_ref : VMEM (16, Rp)   scratch: centered input (x - mean_x)
    col_ref: VMEM (48, Rp)   scratch: stage-1 output slabs, reused for the stage-3 matmul result
    """
    rp = p_ref.shape[1]
    inv_r = 1.0 / valid_r              # compile-time constants
    inv_cnt = 1.0 / (16.0 * valid_r)

    # validity mask for zero-padded lanes (excluded from every BN statistic)
    lane = jax.lax.broadcasted_iota(jnp.int32, (1, rp), 1)
    msk = (lane < valid_r).astype(jnp.float32)

    # ---- stage 1: Conv4d(1->3, k=1) + BN(3) + LeakyReLU ------------------------
    # y1_c = w_c * x  =>  mean_c = w_c*mean(x),  var_c = w_c^2*var(x); only the
    # centered input is materialized (once, into a VMEM scratch).
    px = p_ref[...]                                                          # (16, Rp)
    sx = jnp.sum(jnp.sum(px, axis=1, keepdims=True), axis=0, keepdims=True)  # (1, 1)
    sxx = jnp.sum(jnp.sum(px * px, axis=1, keepdims=True), axis=0, keepdims=True)
    mean_x = sx * inv_cnt
    var_x = sxx * inv_cnt - mean_x * mean_x
    xc_ref[...] = px - mean_x                                                # centered x

    for ci in range(3):
        w = w1_ref[ci]                                                       # SMEM scalar
        scale = w * jax.lax.rsqrt(w * w * var_x + EPS)                       # (1, 1)
        col_ref[ci * 16:(ci + 1) * 16, :] = _leaky(xc_ref[...] * scale)

    # ---- stage 2: Conv4d(3->6, k=2, s=2) as ONE (6,48)x(48,Rp) MXU matmul ------
    acc = jnp.dot(w2_ref[...], col_ref[...],
                  preferred_element_type=jnp.float32)                        # (6, Rp)
    am = acc * msk
    s2 = jnp.sum(am, axis=1, keepdims=True) * inv_r                          # (6, 1)
    q2 = jnp.sum(am * acc, axis=1, keepdims=True) * inv_r                    # (6, 1)
    y2 = _leaky((acc - s2) * jax.lax.rsqrt(q2 - s2 * s2 + EPS))
    y2 = y2 * msk        # zero the padded lanes ONCE; stage 3 inherits them

    # ---- stage 3: ConvTranspose4d(6->3, k=2, s=2) as ONE (48,6)x(6,Rp) matmul --
    # result streams straight into the (48, Rp) scratch (col slabs are dead now)
    col_ref[...] = jnp.dot(w3_ref[...], y2, preferred_element_type=jnp.float32)

    for co in range(3):
        zc = col_ref[co * 16:(co + 1) * 16, :]                               # (16, Rp)
        s3 = jnp.sum(jnp.sum(zc, axis=1, keepdims=True), axis=0, keepdims=True) * inv_cnt
        q3 = jnp.sum(jnp.sum(zc * zc, axis=1, keepdims=True), axis=0, keepdims=True) * inv_cnt
        zn = (zc - s3) * jax.lax.rsqrt(q3 - s3 * s3 + EPS)
        # sigmoid(z) = 0.5*tanh(z/2) + 0.5 -> one EUP transcendental per element
        o_ref[co * 16:(co + 1) * 16, :] = 0.5 * jnp.tanh(0.5 * zn) + 0.5


# ----------------------------- forward wrapper -----------------------------

def forward(x, w1, w2, w3):
    N, _, d1, d2, d3, d4 = x.shape
    o1, o2, o3, o4 = d1 // 2, d2 // 2, d3 // 2, d4 // 2
    R = N * o1 * o2 * o3 * o4
    Rp = ((R + 127) // 128) * 128

    # space-to-depth im2col: one reshape + one transpose (+ lane padding to a 128-multiple);
    # allow_input_fusion lets XLA fold this producer into the pallas operand.
    xr = x.astype(jnp.float32).reshape(N, o1, 2, o2, 2, o3, 2, o4, 2)
    p = xr.transpose(2, 4, 6, 8, 0, 1, 3, 5, 7).reshape(16, R)   # rows=(a,b,c,d), lanes=(n,i,j,k,l)
    p = jnp.pad(p, ((0, 0), (0, Rp - R)))

    w1v = w1.reshape(3).astype(jnp.float32)
    w2m = w2.reshape(6, 48).astype(jnp.float32)                               # [co, ci*16+f]
    w3m = w3.reshape(6, 3, 16).transpose(1, 2, 0).reshape(48, 6).astype(jnp.float32)  # [(co,f), ci]

    cost = pl.CostEstimate(
        flops=2 * (6 * 48 + 48 * 6) * Rp + 80 * 16 * Rp,
        transcendentals=48 * Rp,
        bytes_accessed=(16 + 48) * Rp * 4,
    )

    y3 = pl.pallas_call(
        functools.partial(_fused_kernel, valid_r=R),
        out_shape=jax.ShapeDtypeStruct((48, Rp), jnp.float32),
        in_specs=[
            pl.BlockSpec(memory_space=pltpu.MemorySpace.SMEM),   # w1 (3,)
            pl.BlockSpec(memory_space=pltpu.MemorySpace.VMEM),   # p  (16, Rp)
            pl.BlockSpec(memory_space=pltpu.MemorySpace.VMEM),   # w2 (6, 48)
            pl.BlockSpec(memory_space=pltpu.MemorySpace.VMEM),   # w3 (48, 6)
        ],
        out_specs=pl.BlockSpec(memory_space=pltpu.MemorySpace.VMEM),
        scratch_shapes=[
            pltpu.VMEM((16, Rp), jnp.float32),   # centered input
            pltpu.VMEM((48, Rp), jnp.float32),   # col slabs, reused for stage-3 result
        ],
        compiler_params=pltpu.CompilerParams(
            vmem_limit_bytes=8 << 20,
            allow_input_fusion=[False, True, False, False],
        ),
        cost_estimate=cost,
    )(w1v, p, w2m, w3m)

    # depth-to-space epilogue: drop lane padding, one transpose back to (N, 3, d1, d2, d3, d4)
    y = y3[:, :R].reshape(3, 2, 2, 2, 2, N, o1, o2, o3, o4)
    out = y.transpose(5, 0, 6, 1, 7, 2, 8, 3, 9, 4).reshape(N, 3, d1, d2, d3, d4)
    return out


# ----------------------------- pure-JAX reference -----------------------------

def _bn(y):
    axes = (0,) + tuple(range(2, y.ndim))
    m = jnp.mean(y, axis=axes, keepdims=True)
    v = jnp.mean((y - m) ** 2, axis=axes, keepdims=True)
    return (y - m) / jnp.sqrt(v + EPS)


def reference(x, w1, w2, w3):
    N, _, d1, d2, d3, d4 = x.shape
    y = jnp.einsum('oi,nidefg->nodefg', w1.reshape(3, 1), x.astype(jnp.float32))
    y = _leaky(_bn(y))
    out = jnp.zeros((N, 6, d1 // 2, d2 // 2, d3 // 2, d4 // 2), jnp.float32)
    for a in range(2):
        for b in range(2):
            for c in range(2):
                for d in range(2):
                    xs = y[:, :, a::2, b::2, c::2, d::2]
                    out = out + jnp.einsum('oi,nidefg->nodefg', w2[:, :, a, b, c, d], xs)
    out = _leaky(_bn(out))
    z = jnp.zeros((N, 3, d1, d2, d3, d4), jnp.float32)
    for a in range(2):
        for b in range(2):
            for c in range(2):
                for d in range(2):
                    contrib = jnp.einsum('io,nidefg->nodefg', w3[:, :, a, b, c, d], out)
                    z = z.at[:, :, a::2, b::2, c::2, d::2].set(contrib)
    return 1.0 / (1.0 + jnp.exp(-_bn(z)))


# ----------------------------- main -----------------------------

if __name__ == "__main__":
    key = jax.random.PRNGKey(0)
    kx, kw1, kw2, kw3 = jax.random.split(key, 4)

    # input matching torch.rand(2, 1, 10, 10, 10, 10)
    x = jax.random.uniform(kx, (2, 1, 10, 10, 10, 10), jnp.float32)

    # deterministic kaiming-uniform-style init (all convs have bias=False)
    w1 = jax.random.uniform(kw1, (3, 1, 1, 1, 1, 1), jnp.float32, -1.0, 1.0)
    b2 = 1.0 / (3 * 16) ** 0.5
    w2 = jax.random.uniform(kw2, (6, 3, 2, 2, 2, 2), jnp.float32, -b2, b2)
    b3 = 1.0 / (6 * 16) ** 0.5
    w3 = jax.random.uniform(kw3, (6, 3, 2, 2, 2, 2), jnp.float32, -b3, b3)  # (C_in, C_out, 2,2,2,2)

    fwd = jax.jit(forward)
    out = jax.block_until_ready(fwd(x, w1, w2, w3))
    assert out.shape == (2, 3, 10, 10, 10, 10), out.shape

    ref = jax.block_until_ready(reference(x, w1, w2, w3))
    max_err = float(jnp.max(jnp.abs(out - ref)))
    assert max_err < 5e-2, f"max abs error {max_err}"

    print("KERNEL_OK")
</pallas_src>

<mosaic_0001>
module attributes {stable_mosaic.version = 11 : i64} {
  func.func @_fused_kernel(%arg0: memref<3xf32, #tpu.memory_space<smem>>, %arg1: memref<16x1280xf32, #tpu.memory_space<vmem>>, %arg2: memref<6x48xf32, #tpu.memory_space<vmem>>, %arg3: memref<48x6xf32, #tpu.memory_space<vmem>>, %arg4: memref<48x1280xf32, #tpu.memory_space<vmem>>, %arg5: memref<16x1280xf32, #tpu.memory_space<vmem>>, %arg6: memref<48x1280xf32, #tpu.memory_space<vmem>>) attributes {dimension_semantics = [], scalar_prefetch = 0 : i64, scratch_operands = 2 : i64, tpu.core_type = #tpu.core_type<tc>} {
    %0 = tpu.iota {dimensions = array<i32: 1>} : vector<1x1280xi32>
    %c1250_i32 = arith.constant 1250 : i32
    %1 = vector.broadcast %c1250_i32 : i32 to vector<1x1280xi32>
    %2 = arith.cmpi slt, %0, %1 : vector<1x1280xi32>
    %3 = arith.extui %2 : vector<1x1280xi1> to vector<1x1280xi32>
    %4 = arith.sitofp %3 : vector<1x1280xi32> to vector<1x1280xf32>
    %c0 = arith.constant 0 : index
    %c0_0 = arith.constant 0 : index
    %5 = vector.load %arg1[%c0, %c0_0] : memref<16x1280xf32, #tpu.memory_space<vmem>>, vector<16x1280xf32>
    %cst = arith.constant dense<0.000000e+00> : vector<16xf32>
    %6 = vector.multi_reduction <add>, %5, %cst [1] : vector<16x1280xf32> to vector<16xf32>
    %7 = vector.shape_cast %6 : vector<16xf32> to vector<16x1xf32>
    %cst_1 = arith.constant dense<0.000000e+00> : vector<1xf32>
    %8 = vector.multi_reduction <add>, %7, %cst_1 [0] : vector<16x1xf32> to vector<1xf32>
    %9 = vector.shape_cast %8 : vector<1xf32> to vector<1x1xf32>
    %10 = arith.mulf %5, %5 : vector<16x1280xf32>
    %cst_2 = arith.constant dense<0.000000e+00> : vector<16xf32>
    %11 = vector.multi_reduction <add>, %10, %cst_2 [1] : vector<16x1280xf32> to vector<16xf32>
    %12 = vector.shape_cast %11 : vector<16xf32> to vector<16x1xf32>
    %cst_3 = arith.constant dense<0.000000e+00> : vector<1xf32>
    %13 = vector.multi_reduction <add>, %12, %cst_3 [0] : vector<16x1xf32> to vector<1xf32>
    %14 = vector.shape_cast %13 : vector<1xf32> to vector<1x1xf32>
    %cst_4 = arith.constant 5.000000e-05 : f32
    %15 = vector.broadcast %cst_4 : f32 to vector<1x1xf32>
    %16 = arith.mulf %9, %15 : vector<1x1xf32>
    %cst_5 = arith.constant 5.000000e-05 : f32
    %17 = vector.broadcast %cst_5 : f32 to vector<1x1xf32>
    %18 = arith.mulf %14, %17 : vector<1x1xf32>
    %19 = arith.mulf %16, %16 : vector<1x1xf32>
    %20 = arith.subf %18, %19 : vector<1x1xf32>
    %21 = vector.broadcast %16 : vector<1x1xf32> to vector<16x1280xf32>
    %22 = arith.subf %5, %21 : vector<16x1280xf32>
    %c0_6 = arith.constant 0 : index
    %c0_7 = arith.constant 0 : index
    %23 = vector.load %arg5[%c0_6, %c0_7] : memref<16x1280xf32, #tpu.memory_space<vmem>>, vector<16x1280xf32>
    tpu.vector_store %arg5[%c0_6, %c0_7], %22 {strides = array<i32>} : memref<16x1280xf32, #tpu.memory_space<vmem>>, vector<16x1280xf32>,
    %c0_8 = arith.constant 0 : index
    %24 = memref.load %arg0[%c0_8] : memref<3xf32, #tpu.memory_space<smem>>
    %25 = arith.mulf %24, %24 : f32
    %26 = vector.broadcast %25 : f32 to vector<1x1xf32>
    %27 = arith.mulf %26, %20 : vector<1x1xf32>
    %cst_9 = arith.constant 9.99999974E-6 : f32
    %28 = vector.broadcast %cst_9 : f32 to vector<1x1xf32>
    %29 = arith.addf %27, %28 : vector<1x1xf32>
    %30 = math.rsqrt %29 : vector<1x1xf32>
    %31 = vector.broadcast %24 : f32 to vector<1x1xf32>
    %32 = arith.mulf %31, %30 : vector<1x1xf32>
    %c0_10 = arith.constant 0 : index
    %c0_11 = arith.constant 0 : index
    %33 = vector.load %arg5[%c0_10, %c0_11] : memref<16x1280xf32, #tpu.memory_space<vmem>>, vector<16x1280xf32>
    %34 = vector.broadcast %32 : vector<1x1xf32> to vector<16x1280xf32>
    %35 = arith.mulf %33, %34 : vector<16x1280xf32>
    %cst_12 = arith.constant 0.000000e+00 : f32
    %36 = vector.broadcast %cst_12 : f32 to vector<16x1280xf32>
    %37 = arith.cmpf oge, %35, %36 : vector<16x1280xf32>
    %cst_13 = arith.constant 0.00999999977 : f32
    %38 = vector.broadcast %cst_13 : f32 to vector<16x1280xf32>
    %39 = arith.mulf %38, %35 : vector<16x1280xf32>
    %40 = arith.select %37, %35, %39 : vector<16x1280xi1>, vector<16x1280xf32>
    %c0_14 = arith.constant 0 : index
    %c0_15 = arith.constant 0 : index
    %41 = vector.load %arg6[%c0_14, %c0_15] : memref<48x1280xf32, #tpu.memory_space<vmem>>, vector<16x1280xf32>
    tpu.vector_store %arg6[%c0_14, %c0_15], %40 {strides = array<i32>} : memref<48x1280xf32, #tpu.memory_space<vmem>>, vector<16x1280xf32>,
    %c1 = arith.constant 1 : index
    %42 = memref.load %arg0[%c1] : memref<3xf32, #tpu.memory_space<smem>>
    %43 = arith.mulf %42, %42 : f32
    %44 = vector.broadcast %43 : f32 to vector<1x1xf32>
    %45 = arith.mulf %44, %20 : vector<1x1xf32>
    %cst_16 = arith.constant 9.99999974E-6 : f32
    %46 = vector.broadcast %cst_16 : f32 to vector<1x1xf32>
    %47 = arith.addf %45, %46 : vector<1x1xf32>
    %48 = math.rsqrt %47 : vector<1x1xf32>
    %49 = vector.broadcast %42 : f32 to vector<1x1xf32>
    %50 = arith.mulf %49, %48 : vector<1x1xf32>
    %c0_17 = arith.constant 0 : index
    %c0_18 = arith.constant 0 : index
    %51 = vector.load %arg5[%c0_17, %c0_18] : memref<16x1280xf32, #tpu.memory_space<vmem>>, vector<16x1280xf32>
    %52 = vector.broadcast %50 : vector<1x1xf32> to vector<16x1280xf32>
    %53 = arith.mulf %51, %52 : vector<16x1280xf32>
    %cst_19 = arith.constant 0.000000e+00 : f32
    %54 = vector.broadcast %cst_19 : f32 to vector<16x1280xf32>
    %55 = arith.cmpf oge, %53, %54 : vector<16x1280xf32>
    %cst_20 = arith.constant 0.00999999977 : f32
    %56 = vector.broadcast %cst_20 : f32 to vector<16x1280xf32>
    %57 = arith.mulf %56, %53 : vector<16x1280xf32>
    %58 = arith.select %55, %53, %57 : vector<16x1280xi1>, vector<16x1280xf32>
    %c16 = arith.constant 16 : index
    %c0_21 = arith.constant 0 : index
    %59 = vector.load %arg6[%c16, %c0_21] : memref<48x1280xf32, #tpu.memory_space<vmem>>, vector<16x1280xf32>
    tpu.vector_store %arg6[%c16, %c0_21], %58 {strides = array<i32>} : memref<48x1280xf32, #tpu.memory_space<vmem>>, vector<16x1280xf32>,
    %c2 = arith.constant 2 : index
    %60 = memref.load %arg0[%c2] : memref<3xf32, #tpu.memory_space<smem>>
    %61 = arith.mulf %60, %60 : f32
    %62 = vector.broadcast %61 : f32 to vector<1x1xf32>
    %63 = arith.mulf %62, %20 : vector<1x1xf32>
    %cst_22 = arith.constant 9.99999974E-6 : f32
    %64 = vector.broadcast %cst_22 : f32 to vector<1x1xf32>
    %65 = arith.addf %63, %64 : vector<1x1xf32>
    %66 = math.rsqrt %65 : vector<1x1xf32>
    %67 = vector.broadcast %60 : f32 to vector<1x1xf32>
    %68 = arith.mulf %67, %66 : vector<1x1xf32>
    %c0_23 = arith.constant 0 : index
    %c0_24 = arith.constant 0 : index
    %69 = vector.load %arg5[%c0_23, %c0_24] : memref<16x1280xf32, #tpu.memory_space<vmem>>, vector<16x1280xf32>
    %70 = vector.broadcast %68 : vector<1x1xf32> to vector<16x1280xf32>
    %71 = arith.mulf %69, %70 : vector<16x1280xf32>
    %cst_25 = arith.constant 0.000000e+00 : f32
    %72 = vector.broadcast %cst_25 : f32 to vector<16x1280xf32>
    %73 = arith.cmpf oge, %71, %72 : vector<16x1280xf32>
    %cst_26 = arith.constant 0.00999999977 : f32
    %74 = vector.broadcast %cst_26 : f32 to vector<16x1280xf32>
    %75 = arith.mulf %74, %71 : vector<16x1280xf32>
    %76 = arith.select %73, %71, %75 : vector<16x1280xi1>, vector<16x1280xf32>
    %c32 = arith.constant 32 : index
    %c0_27 = arith.constant 0 : index
    %77 = vector.load %arg6[%c32, %c0_27] : memref<48x1280xf32, #tpu.memory_space<vmem>>, vector<16x1280xf32>
    tpu.vector_store %arg6[%c32, %c0_27], %76 {strides = array<i32>} : memref<48x1280xf32, #tpu.memory_space<vmem>>, vector<16x1280xf32>,
    %c0_28 = arith.constant 0 : index
    %c0_29 = arith.constant 0 : index
    %78 = vector.load %arg2[%c0_28, %c0_29] : memref<6x48xf32, #tpu.memory_space<vmem>>, vector<6x48xf32>
    %c0_30 = arith.constant 0 : index
    %c0_31 = arith.constant 0 : index
    %79 = vector.load %arg6[%c0_30, %c0_31] : memref<48x1280xf32, #tpu.memory_space<vmem>>, vector<48x1280xf32>
    %cst_32 = arith.constant dense<0.000000e+00> : vector<6x1280xf32>
    %80 = tpu.matmul %78, %79, %cst_32 {dimension_numbers = #tpu.dot_dimension_numbers<[1], [0], [0], [1], [0, 0, 1, 1], [], []>} : vector<6x48xf32>, vector<48x1280xf32>, vector<6x1280xf32> -> vector<6x1280xf32>
    %81 = vector.broadcast %4 : vector<1x1280xf32> to vector<6x1280xf32>
    %82 = arith.mulf %80, %81 : vector<6x1280xf32>
    %cst_33 = arith.constant dense<0.000000e+00> : vector<6xf32>
    %83 = vector.multi_reduction <add>, %82, %cst_33 [1] : vector<6x1280xf32> to vector<6xf32>
    %84 = vector.shape_cast %83 : vector<6xf32> to vector<6x1xf32>
    %cst_34 = arith.constant 8.000000e-04 : f32
    %85 = vector.broadcast %cst_34 : f32 to vector<6x1xf32>
    %86 = arith.mulf %84, %85 : vector<6x1xf32>
    %87 = arith.mulf %82, %80 : vector<6x1280xf32>
    %cst_35 = arith.constant dense<0.000000e+00> : vector<6xf32>
    %88 = vector.multi_reduction <add>, %87, %cst_35 [1] : vector<6x1280xf32> to vector<6xf32>
    %89 = vector.shape_cast %88 : vector<6xf32> to vector<6x1xf32>
    %cst_36 = arith.constant 8.000000e-04 : f32
    %90 = vector.broadcast %cst_36 : f32 to vector<6x1xf32>
    %91 = arith.mulf %89, %90 : vector<6x1xf32>
    %92 = vector.broadcast %86 : vector<6x1xf32> to vector<6x1280xf32>
    %93 = arith.subf %80, %92 : vector<6x1280xf32>
    %94 = arith.mulf %86, %86 : vector<6x1xf32>
    %95 = arith.subf %91, %94 : vector<6x1xf32>
    %cst_37 = arith.constant 9.99999974E-6 : f32
    %96 = vector.broadcast %cst_37 : f32 to vector<6x1xf32>
    %97 = arith.addf %95, %96 : vector<6x1xf32>
    %98 = math.rsqrt %97 : vector<6x1xf32>
    %99 = vector.broadcast %98 : vector<6x1xf32> to vector<6x1280xf32>
    %100 = arith.mulf %93, %99 : vector<6x1280xf32>
    %cst_38 = arith.constant 0.000000e+00 : f32
    %101 = vector.broadcast %cst_38 : f32 to vector<6x1280xf32>
    %102 = arith.cmpf oge, %100, %101 : vector<6x1280xf32>
    %cst_39 = arith.constant 0.00999999977 : f32
    %103 = vector.broadcast %cst_39 : f32 to vector<6x1280xf32>
    %104 = arith.mulf %103, %100 : vector<6x1280xf32>
    %105 = arith.select %102, %100, %104 : vector<6x1280xi1>, vector<6x1280xf32>
    %106 = vector.broadcast %4 : vector<1x1280xf32> to vector<6x1280xf32>
    %107 = arith.mulf %105, %106 : vector<6x1280xf32>
    %c0_40 = arith.constant 0 : index
    %c0_41 = arith.constant 0 : index
    %108 = vector.load %arg3[%c0_40, %c0_41] : memref<48x6xf32, #tpu.memory_space<vmem>>, vector<48x6xf32>
    %cst_42 = arith.constant dense<0.000000e+00> : vector<48x1280xf32>
    %109 = tpu.matmul %108, %107, %cst_42 {dimension_numbers = #tpu.dot_dimension_numbers<[1], [0], [0], [1], [0, 0, 1, 1], [], []>} : vector<48x6xf32>, vector<6x1280xf32>, vector<48x1280xf32> -> vector<48x1280xf32>
    %c0_43 = arith.constant 0 : index
    %c0_44 = arith.constant 0 : index
    %110 = vector.load %arg6[%c0_43, %c0_44] : memref<48x1280xf32, #tpu.memory_space<vmem>>, vector<48x1280xf32>
    tpu.vector_store %arg6[%c0_43, %c0_44], %109 {strides = array<i32>} : memref<48x1280xf32, #tpu.memory_space<vmem>>, vector<48x1280xf32>,
    %c0_45 = arith.constant 0 : index
    %c0_46 = arith.constant 0 : index
    %111 = vector.load %arg6[%c0_45, %c0_46] : memref<48x1280xf32, #tpu.memory_space<vmem>>, vector<16x1280xf32>
    %cst_47 = arith.constant dense<0.000000e+00> : vector<16xf32>
    %112 = vector.multi_reduction <add>, %111, %cst_47 [1] : vector<16x1280xf32> to vector<16xf32>
    %113 = vector.shape_cast %112 : vector<16xf32> to vector<16x1xf32>
    %cst_48 = arith.constant dense<0.000000e+00> : vector<1xf32>
    %114 = vector.multi_reduction <add>, %113, %cst_48 [0] : vector<16x1xf32> to vector<1xf32>
    %115 = vector.shape_cast %114 : vector<1xf32> to vector<1x1xf32>
    %cst_49 = arith.constant 5.000000e-05 : f32
    %116 = vector.broadcast %cst_49 : f32 to vector<1x1xf32>
    %117 = arith.mulf %115, %116 : vector<1x1xf32>
    %118 = arith.mulf %111, %111 : vector<16x1280xf32>
    %cst_50 = arith.constant dense<0.000000e+00> : vector<16xf32>
    %119 = vector.multi_reduction <add>, %118, %cst_50 [1] : vector<16x1280xf32> to vector<16xf32>
    %120 = vector.shape_cast %119 : vector<16xf32> to vector<16x1xf32>
    %cst_51 = arith.constant dense<0.000000e+00> : vector<1xf32>
    %121 = vector.multi_reduction <add>, %120, %cst_51 [0] : vector<16x1xf32> to vector<1xf32>
    %122 = vector.shape_cast %121 : vector<1xf32> to vector<1x1xf32>
    %cst_52 = arith.constant 5.000000e-05 : f32
    %123 = vector.broadcast %cst_52 : f32 to vector<1x1xf32>
    %124 = arith.mulf %122, %123 : vector<1x1xf32>
    %125 = vector.broadcast %117 : vector<1x1xf32> to vector<16x1280xf32>
    %126 = arith.subf %111, %125 : vector<16x1280xf32>
    %127 = arith.mulf %117, %117 : vector<1x1xf32>
    %128 = arith.subf %124, %127 : vector<1x1xf32>
    %cst_53 = arith.constant 9.99999974E-6 : f32
    %129 = vector.broadcast %cst_53 : f32 to vector<1x1xf32>
    %130 = arith.addf %128, %129 : vector<1x1xf32>
    %131 = math.rsqrt %130 : vector<1x1xf32>
    %132 = vector.broadcast %131 : vector<1x1xf32> to vector<16x1280xf32>
    %133 = arith.mulf %126, %132 : vector<16x1280xf32>
    %cst_54 = arith.constant 5.000000e-01 : f32
    %134 = vector.broadcast %cst_54 : f32 to vector<16x1280xf32>
    %135 = arith.mulf %134, %133 : vector<16x1280xf32>
    %136 = math.tanh %135 : vector<16x1280xf32>
    %cst_55 = arith.constant 5.000000e-01 : f32
    %137 = vector.broadcast %cst_55 : f32 to vector<16x1280xf32>
    %138 = arith.mulf %137, %136 : vector<16x1280xf32>
    %cst_56 = arith.constant 5.000000e-01 : f32
    %139 = vector.broadcast %cst_56 : f32 to vector<16x1280xf32>
    %140 = arith.addf %138, %139 : vector<16x1280xf32>
    %c0_57 = arith.constant 0 : index
    %c0_58 = arith.constant 0 : index
    %141 = vector.load %arg4[%c0_57, %c0_58] : memref<48x1280xf32, #tpu.memory_space<vmem>>, vector<16x1280xf32>
    tpu.vector_store %arg4[%c0_57, %c0_58], %140 {strides = array<i32>} : memref<48x1280xf32, #tpu.memory_space<vmem>>, vector<16x1280xf32>,
    %c16_59 = arith.constant 16 : index
    %c0_60 = arith.constant 0 : index
    %142 = vector.load %arg6[%c16_59, %c0_60] : memref<48x1280xf32, #tpu.memory_space<vmem>>, vector<16x1280xf32>
    %cst_61 = arith.constant dense<0.000000e+00> : vector<16xf32>
    %143 = vector.multi_reduction <add>, %142, %cst_61 [1] : vector<16x1280xf32> to vector<16xf32>
    %144 = vector.shape_cast %143 : vector<16xf32> to vector<16x1xf32>
    %cst_62 = arith.constant dense<0.000000e+00> : vector<1xf32>
    %145 = vector.multi_reduction <add>, %144, %cst_62 [0] : vector<16x1xf32> to vector<1xf32>
    %146 = vector.shape_cast %145 : vector<1xf32> to vector<1x1xf32>
    %cst_63 = arith.constant 5.000000e-05 : f32
    %147 = vector.broadcast %cst_63 : f32 to vector<1x1xf32>
    %148 = arith.mulf %146, %147 : vector<1x1xf32>
    %149 = arith.mulf %142, %142 : vector<16x1280xf32>
    %cst_64 = arith.constant dense<0.000000e+00> : vector<16xf32>
    %150 = vector.multi_reduction <add>, %149, %cst_64 [1] : vector<16x1280xf32> to vector<16xf32>
    %151 = vector.shape_cast %150 : vector<16xf32> to vector<16x1xf32>
    %cst_65 = arith.constant dense<0.000000e+00> : vector<1xf32>
    %152 = vector.multi_reduction <add>, %151, %cst_65 [0] : vector<16x1xf32> to vector<1xf32>
    %153 = vector.shape_cast %152 : vector<1xf32> to vector<1x1xf32>
    %cst_66 = arith.constant 5.000000e-05 : f32
    %154 = vector.broadcast %cst_66 : f32 to vector<1x1xf32>
    %155 = arith.mulf %153, %154 : vector<1x1xf32>
    %156 = vector.broadcast %148 : vector<1x1xf32> to vector<16x1280xf32>
    %157 = arith.subf %142, %156 : vector<16x1280xf32>
    %158 = arith.mulf %148, %148 : vector<1x1xf32>
    %159 = arith.subf %155, %158 : vector<1x1xf32>
    %cst_67 = arith.constant 9.99999974E-6 : f32
    %160 = vector.broadcast %cst_67 : f32 to vector<1x1xf32>
    %161 = arith.addf %159, %160 : vector<1x1xf32>
    %162 = math.rsqrt %161 : vector<1x1xf32>
    %163 = vector.broadcast %162 : vector<1x1xf32> to vector<16x1280xf32>
    %164 = arith.mulf %157, %163 : vector<16x1280xf32>
    %cst_68 = arith.constant 5.000000e-01 : f32
    %165 = vector.broadcast %cst_68 : f32 to vector<16x1280xf32>
    %166 = arith.mulf %165, %164 : vector<16x1280xf32>
    %167 = math.tanh %166 : vector<16x1280xf32>
    %cst_69 = arith.constant 5.000000e-01 : f32
    %168 = vector.broadcast %cst_69 : f32 to vector<16x1280xf32>
    %169 = arith.mulf %168, %167 : vector<16x1280xf32>
    %cst_70 = arith.constant 5.000000e-01 : f32
    %170 = vector.broadcast %cst_70 : f32 to vector<16x1280xf32>
    %171 = arith.addf %169, %170 : vector<16x1280xf32>
    %c16_71 = arith.constant 16 : index
    %c0_72 = arith.constant 0 : index
    %172 = vector.load %arg4[%c16_71, %c0_72] : memref<48x1280xf32, #tpu.memory_space<vmem>>, vector<16x1280xf32>
    tpu.vector_store %arg4[%c16_71, %c0_72], %171 {strides = array<i32>} : memref<48x1280xf32, #tpu.memory_space<vmem>>, vector<16x1280xf32>,
    %c32_73 = arith.constant 32 : index
    %c0_74 = arith.constant 0 : index
    %173 = vector.load %arg6[%c32_73, %c0_74] : memref<48x1280xf32, #tpu.memory_space<vmem>>, vector<16x1280xf32>
    %cst_75 = arith.constant dense<0.000000e+00> : vector<16xf32>
    %174 = vector.multi_reduction <add>, %173, %cst_75 [1] : vector<16x1280xf32> to vector<16xf32>
    %175 = vector.shape_cast %174 : vector<16xf32> to vector<16x1xf32>
    %cst_76 = arith.constant dense<0.000000e+00> : vector<1xf32>
    %176 = vector.multi_reduction <add>, %175, %cst_76 [0] : vector<16x1xf32> to vector<1xf32>
    %177 = vector.shape_cast %176 : vector<1xf32> to vector<1x1xf32>
    %cst_77 = arith.constant 5.000000e-05 : f32
    %178 = vector.broadcast %cst_77 : f32 to vector<1x1xf32>
    %179 = arith.mulf %177, %178 : vector<1x1xf32>
    %180 = arith.mulf %173, %173 : vector<16x1280xf32>
    %cst_78 = arith.constant dense<0.000000e+00> : vector<16xf32>
    %181 = vector.multi_reduction <add>, %180, %cst_78 [1] : vector<16x1280xf32> to vector<16xf32>
    %182 = vector.shape_cast %181 : vector<16xf32> to vector<16x1xf32>
    %cst_79 = arith.constant dense<0.000000e+00> : vector<1xf32>
    %183 = vector.multi_reduction <add>, %182, %cst_79 [0] : vector<16x1xf32> to vector<1xf32>
    %184 = vector.shape_cast %183 : vector<1xf32> to vector<1x1xf32>
    %cst_80 = arith.constant 5.000000e-05 : f32
    %185 = vector.broadcast %cst_80 : f32 to vector<1x1xf32>
    %186 = arith.mulf %184, %185 : vector<1x1xf32>
    %187 = vector.broadcast %179 : vector<1x1xf32> to vector<16x1280xf32>
    %188 = arith.subf %173, %187 : vector<16x1280xf32>
    %189 = arith.mulf %179, %179 : vector<1x1xf32>
    %190 = arith.subf %186, %189 : vector<1x1xf32>
    %cst_81 = arith.constant 9.99999974E-6 : f32
    %191 = vector.broadcast %cst_81 : f32 to vector<1x1xf32>
    %192 = arith.addf %190, %191 : vector<1x1xf32>
    %193 = math.rsqrt %192 : vector<1x1xf32>
    %194 = vector.broadcast %193 : vector<1x1xf32> to vector<16x1280xf32>
    %195 = arith.mulf %188, %194 : vector<16x1280xf32>
    %cst_82 = arith.constant 5.000000e-01 : f32
    %196 = vector.broadcast %cst_82 : f32 to vector<16x1280xf32>
    %197 = arith.mulf %196, %195 : vector<16x1280xf32>
    %198 = math.tanh %197 : vector<16x1280xf32>
    %cst_83 = arith.constant 5.000000e-01 : f32
    %199 = vector.broadcast %cst_83 : f32 to vector<16x1280xf32>
    %200 = arith.mulf %199, %198 : vector<16x1280xf32>
    %cst_84 = arith.constant 5.000000e-01 : f32
    %201 = vector.broadcast %cst_84 : f32 to vector<16x1280xf32>
    %202 = arith.addf %200, %201 : vector<16x1280xf32>
    %c32_85 = arith.constant 32 : index
    %c0_86 = arith.constant 0 : index
    %203 = vector.load %arg4[%c32_85, %c0_86] : memref<48x1280xf32, #tpu.memory_space<vmem>>, vector<16x1280xf32>
    tpu.vector_store %arg4[%c32_85, %c0_86], %202 {strides = array<i32>} : memref<48x1280xf32, #tpu.memory_space<vmem>>, vector<16x1280xf32>,
    return
  }
}

</mosaic_0001>

<llo_original>
// kernel: forward.2
$region0: #{forward.2}
  #allocation0 [shape = 'u32[]', space=smem, size = 0x4, offset = 0x4, fixed_abs, tag = 'smem constant byte address 0x4 - core index']
  #allocation1 [shape = 'u32[72,128]{1,0:T(1,128)}', space=vmem, size = 0x9000, scoped, tag = 'internal scratch']
  #allocation2 [shape = 'f32[16,1280]{1,0:T(8,128)}', space=vmem, size = 0x14000, scoped, tag = 'scratch operand']
  #allocation3 [shape = 'f32[48,1280]{1,0:T(8,128)}', space=vmem, size = 0x3c000, scoped, tag = 'scratch operand']
  #allocation4 [shape = 'u32[2048]{0}', space=vmem, size = 0x2000, scoped, tag = 'scoped memory for forward.2']
  #allocation5 [shape = 'u32[2048]{0}', space=vmem, size = 0x2000, scoped, tag = 'scoped memory for forward.2']
  #allocation6 [shape = 'u32[2048]{0}', space=vmem, size = 0x2000, scoped, tag = 'scoped memory for forward.2']
  #allocation7 [shape = 'u32[2048]{0}', space=vmem, size = 0x2000, scoped, tag = 'scoped memory for forward.2']
  #allocation8 [shape = 'u32[2048]{0}', space=vmem, size = 0x2000, scoped, tag = 'scoped memory for forward.2']
  %s0 = inlined_call_operand.vmem [shape: f32[3], index: 0, kind: input, shape index: {}]
  %s1 = inlined_call_operand.vmem [shape: f32[6,48], index: 1, kind: input, shape index: {}]
  %s2 = inlined_call_operand.vmem [shape: f32[48,6], index: 2, kind: input, shape index: {}]
  %s3 = inlined_call_operand.vmem [shape: f32[16,1250], index: 3, kind: input, shape index: {}]
  %s4 = inlined_call_operand.<no memory space> [shape: f32[], index: 4, kind: input, shape index: {}]
  %s5 = inlined_call_operand.vmem [shape: f32[48,1280], index: 5, kind: output, shape index: {}]
  %s6 = sld [smem:[#allocation0]]
  $region30: #{forward.2} parent=0
    _
  %s8 = ssub.s32 1, %s6
  %s9 = scalar_select 0, %s8, %s6
  %v10 = vstv %s4
  $region1: #{forward.2} parent=0
    #allocation9 [shape = 'u8[512]{0}', space=smem, size = 0x200, scoped, tag = 'input window, operand 0, single buffered']
    #allocation10 [shape = 's32[1]{0}', space=sflag, size = 0x4, scoped, tag = 'scoped memory for forward.2']
    #allocation11 [shape = 'u8[81920]{0}', space=vmem, size = 0x14000, dematerialized = true, scoped, tag = 'FusionAdapter Buffer %fusion.1 = f32[16,1280]{1,0:T(8,128)} fusion(%param_3.1, %param_4), kind=kLoop, calls=%fused_computation.1.clone, metadata={op_name="jit(forward)/jit(_pad)/pad" stack_frame_id=9}']
    %11 = vsyncpa [#allocation10], 0
    // Predicated region
    $region2: #{forward.2} parent=1 // pred_check
      _
    $region3: #{forward.2} parent=1 // pred_check_branch
      %13 = sbr.rel (0) target = $region5
    $region4: #{forward.2} parent=1 // pred_region
      %15 = vsyncadd [#allocation10], 0
      %s17 = sshll.u32 %s0, 4
      %s18 = int_to_ptr.vmem [resolvable:$true] %s17
      %20 = dma.vmem_to_smem %s18, 16, [#allocation9], [#allocation10]
    $region5: #{forward.2} parent=1 // pred_fallthru
      _
    // Predicated region
    $region6: #{forward.2} parent=1 // pred_check
      _
    $region7: #{forward.2} parent=1 // pred_check_branch
      %22 = sbr.rel (0) target = $region9
    $region8: #{forward.2} parent=1 // pred_region
      _
    $region9: #{forward.2} parent=1 // pred_fallthru
      _
    // Predicated region
    $region10: #{forward.2} parent=1 // pred_check
      _
    $region11: #{forward.2} parent=1 // pred_check_branch
      %24 = sbr.rel (0) target = $region13
    $region12: #{forward.2} parent=1 // pred_region
      _
    $region13: #{forward.2} parent=1 // pred_fallthru
      _
    // Predicated region
    $region14: #{forward.2} parent=1 // pred_check
      _
    $region15: #{forward.2} parent=1 // pred_check_branch
      %26 = sbr.rel (0) target = $region17
    $region16: #{forward.2} parent=1 // pred_region
      _
    $region17: #{forward.2} parent=1 // pred_fallthru
      _
    // Predicated region
    $region18: #{forward.2} parent=1 // pred_check
      _
    $region19: #{forward.2} parent=1 // pred_check_branch
      %28 = sbr.rel (0) target = $region21
    $region20: #{forward.2} parent=1 // pred_region
      %30 = dma.done [#allocation10], 16
    $region21: #{forward.2} parent=1 // pred_fallthru
      _
    %31 = sfence
    %v32 = vld [vmem:[%s3] sm:$0xff]
    %v33 = vlaneseq
    %v34 = vand.u32 %v33, 127
    %vm36 = vcmp.lt.s32.totalorder %v34, 1250
    %v37 = vsel %vm36, %v32, %v10
    %s39 = ssub.s32 256, 1
    %40 = vst [vmem:[#allocation11] sm:%s39] %v37
    %s41 = scalar_lea.vmem %s3, 8
    %v42 = vld [vmem:[%s41] sm:$0xff]
    %v43 = vlaneseq
    %v44 = vand.u32 %v43, 127
    %v45 = vadd.s32 %v44, 128
    %vm46 = vcmp.lt.s32.totalorder %v45, 1250
    %v47 = vsel %vm46, %v42, %v10
    %s48 = scalar_lea.vmem [#allocation11], 8
    %s50 = ssub.s32 256, 1
    %51 = vst [vmem:[%s48] sm:%s50] %v47
    %s52 = scalar_lea.vmem %s3, 16
    %v53 = vld [vmem:[%s52] sm:$0xff]
    %v54 = vlaneseq
    %v55 = vand.u32 %v54, 127
    %v56 = vadd.s32 %v55, 256
    %vm57 = vcmp.lt.s32.totalorder %v56, 1250
    %v58 = vsel %vm57, %v53, %v10
    %s59 = scalar_lea.vmem [#allocation11], 16
    %s61 = ssub.s32 256, 1
    %62 = vst [vmem:[%s59] sm:%s61] %v58
    %s63 = scalar_lea.vmem %s3, 24
    %v64 = vld [vmem:[%s63] sm:$0xff]
    %v65 = vlaneseq
    %v66 = vand.u32 %v65, 127
    %v67 = vadd.s32 %v66, 384
    %vm68 = vcmp.lt.s32.totalorder %v67, 1250
    %v69 = vsel %vm68, %v64, %v10
    %s70 = scalar_lea.vmem [#allocation11], 24
    %s72 = ssub.s32 256, 1
    %73 = vst [vmem:[%s70] sm:%s72] %v69
    %s74 = scalar_lea.vmem %s3, 32
    %v75 = vld [vmem:[%s74] sm:$0xff]
    %v76 = vlaneseq
    %v77 = vand.u32 %v76, 127
    %v78 = vadd.s32 %v77, 512
    %vm79 = vcmp.lt.s32.totalorder %v78, 1250
    %v80 = vsel %vm79, %v75, %v10
    %s81 = scalar_lea.vmem [#allocation11], 32
    %s83 = ssub.s32 256, 1
    %84 = vst [vmem:[%s81] sm:%s83] %v80
    %s85 = scalar_lea.vmem %s3, 40
    %v86 = vld [vmem:[%s85] sm:$0xff]
    %v87 = vlaneseq
    %v88 = vand.u32 %v87, 127
    %v89 = vadd.s32 %v88, 640
    %vm90 = vcmp.lt.s32.totalorder %v89, 1250
    %v91 = vsel %vm90, %v86, %v10
    %s92 = scalar_lea.vmem [#allocation11], 40
    %s94 = ssub.s32 256, 1
    %95 = vst [vmem:[%s92] sm:%s94] %v91
    %s96 = scalar_lea.vmem %s3, 48
    %v97 = vld [vmem:[%s96] sm:$0xff]
    %v98 = vlaneseq
    %v99 = vand.u32 %v98, 127
    %v100 = vadd.s32 %v99, 768
    %vm101 = vcmp.lt.s32.totalorder %v100, 1250
    %v102 = vsel %vm101, %v97, %v10
    %s103 = scalar_lea.vmem [#allocation11], 48
    %s105 = ssub.s32 256, 1
    %106 = vst [vmem:[%s103] sm:%s105] %v102
    %s107 = scalar_lea.vmem %s3, 56
    %v108 = vld [vmem:[%s107] sm:$0xff]
    %v109 = vlaneseq
    %v110 = vand.u32 %v109, 127
    %v111 = vadd.s32 %v110, 896
    %vm112 = vcmp.lt.s32.totalorder %v111, 1250
    %v113 = vsel %vm112, %v108, %v10
    %s114 = scalar_lea.vmem [#allocation11], 56
    %s116 = ssub.s32 256, 1
    %117 = vst [vmem:[%s114] sm:%s116] %v113
    %s118 = scalar_lea.vmem %s3, 64
    %v119 = vld [vmem:[%s118] sm:$0xff]
    %v120 = vlaneseq
    %v121 = vand.u32 %v120, 127
    %v122 = vadd.s32 %v121, 1024
    %vm123 = vcmp.lt.s32.totalorder %v122, 1250
    %v124 = vsel %vm123, %v119, %v10
    %s125 = scalar_lea.vmem [#allocation11], 64
    %s127 = ssub.s32 256, 1
    %128 = vst [vmem:[%s125] sm:%s127] %v124
    %s129 = scalar_lea.vmem %s3, 72
    %v130 = vld [vmem:[%s129] sm:$0xff]
    %v131 = vlaneseq
    %v132 = vand.u32 %v131, 127
    %v133 = vadd.s32 %v132, 1152
    %vm134 = vcmp.lt.s32.totalorder %v133, 1250
    %v135 = vsel %vm134, %v130, %v10
    %s136 = scalar_lea.vmem [#allocation11], 72
    %s138 = ssub.s32 256, 1
    %139 = vst [vmem:[%s136] sm:%s138] %v135
    %s140 = scalar_lea.vmem %s3, 80
    %v141 = vld [vmem:[%s140] sm:$0xff]
    %v142 = vlaneseq
    %v143 = vand.u32 %v142, 127
    %vm145 = vcmp.lt.s32.totalorder %v143, 1250
    %v146 = vsel %vm145, %v141, %v10
    %s147 = scalar_lea.vmem [#allocation11], 80
    %s149 = ssub.s32 256, 1
    %150 = vst [vmem:[%s147] sm:%s149] %v146
    %s151 = scalar_lea.vmem %s3, 88
    %v152 = vld [vmem:[%s151] sm:$0xff]
    %v153 = vlaneseq
    %v154 = vand.u32 %v153, 127
    %v155 = vadd.s32 %v154, 128
    %vm156 = vcmp.lt.s32.totalorder %v155, 1250
    %v157 = vsel %vm156, %v152, %v10
    %s158 = scalar_lea.vmem [#allocation11], 88
    %s160 = ssub.s32 256, 1
    %161 = vst [vmem:[%s158] sm:%s160] %v157
    %s162 = scalar_lea.vmem %s3, 96
    %v163 = vld [vmem:[%s162] sm:$0xff]
    %v164 = vlaneseq
    %v165 = vand.u32 %v164, 127
    %v166 = vadd.s32 %v165, 256
    %vm167 = vcmp.lt.s32.totalorder %v166, 1250
    %v168 = vsel %vm167, %v163, %v10
    %s169 = scalar_lea.vmem [#allocation11], 96
    %s171 = ssub.s32 256, 1
    %172 = vst [vmem:[%s169] sm:%s171] %v168
    %s173 = scalar_lea.vmem %s3, 104
    %v174 = vld [vmem:[%s173] sm:$0xff]
    %v175 = vlaneseq
    %v176 = vand.u32 %v175, 127
    %v177 = vadd.s32 %v176, 384
    %vm178 = vcmp.lt.s32.totalorder %v177, 1250
    %v179 = vsel %vm178, %v174, %v10
    %s180 = scalar_lea.vmem [#allocation11], 104
    %s182 = ssub.s32 256, 1
    %183 = vst [vmem:[%s180] sm:%s182] %v179
    %s184 = scalar_lea.vmem %s3, 112
    %v185 = vld [vmem:[%s184] sm:$0xff]
    %v186 = vlaneseq
    %v187 = vand.u32 %v186, 127
    %v188 = vadd.s32 %v187, 512
    %vm189 = vcmp.lt.s32.totalorder %v188, 1250
    %v190 = vsel %vm189, %v185, %v10
    %s191 = scalar_lea.vmem [#allocation11], 112
    %s193 = ssub.s32 256, 1
    %194 = vst [vmem:[%s191] sm:%s193] %v190
    %s195 = scalar_lea.vmem %s3, 120
    %v196 = vld [vmem:[%s195] sm:$0xff]
    %v197 = vlaneseq
    %v198 = vand.u32 %v197, 127
    %v199 = vadd.s32 %v198, 640
    %vm200 = vcmp.lt.s32.totalorder %v199, 1250
    %v201 = vsel %vm200, %v196, %v10
    %s202 = scalar_lea.vmem [#allocation11], 120
    %s204 = ssub.s32 256, 1
    %205 = vst [vmem:[%s202] sm:%s204] %v201
    %s206 = scalar_lea.vmem %s3, 128
    %v207 = vld [vmem:[%s206] sm:$0xff]
    %v208 = vlaneseq
    %v209 = vand.u32 %v208, 127
    %v210 = vadd.s32 %v209, 768
    %vm211 = vcmp.lt.s32.totalorder %v210, 1250
    %v212 = vsel %vm211, %v207, %v10
    %s213 = scalar_lea.vmem [#allocation11], 128
    %s215 = ssub.s32 256, 1
    %216 = vst [vmem:[%s213] sm:%s215] %v212
    %s217 = scalar_lea.vmem %s3, 136
    %v218 = vld [vmem:[%s217] sm:$0xff]
    %v219 = vlaneseq
    %v220 = vand.u32 %v219, 127
    %v221 = vadd.s32 %v220, 896
    %vm222 = vcmp.lt.s32.totalorder %v221, 1250
    %v223 = vsel %vm222, %v218, %v10
    %s224 = scalar_lea.vmem [#allocation11], 136
    %s226 = ssub.s32 256, 1
    %227 = vst [vmem:[%s224] sm:%s226] %v223
    %s228 = scalar_lea.vmem %s3, 144
    %v229 = vld [vmem:[%s228] sm:$0xff]
    %v230 = vlaneseq
    %v231 = vand.u32 %v230, 127
    %v232 = vadd.s32 %v231, 1024
    %vm233 = vcmp.lt.s32.totalorder %v232, 1250
    %v234 = vsel %vm233, %v229, %v10
    %s235 = scalar_lea.vmem [#allocation11], 144
    %s237 = ssub.s32 256, 1
    %238 = vst [vmem:[%s235] sm:%s237] %v234
    %s239 = scalar_lea.vmem %s3, 152
    %v240 = vld [vmem:[%s239] sm:$0xff]
    %v241 = vlaneseq
    %v242 = vand.u32 %v241, 127
    %v243 = vadd.s32 %v242, 1152
    %vm244 = vcmp.lt.s32.totalorder %v243, 1250
    %v245 = vsel %vm244, %v240, %v10
    %s246 = scalar_lea.vmem [#allocation11], 152
    %s248 = ssub.s32 256, 1
    %249 = vst [vmem:[%s246] sm:%s248] %v245
    %v250 = vlaneseq
    %v251 = vand.u32 %v250, 127
    %v252 = vadd.s32 %v251, 128
    %v253 = vadd.s32 %v251, 256
    %v254 = vadd.s32 %v251, 384
    %v255 = vadd.s32 %v251, 512
    %v256 = vadd.s32 %v251, 640
    %v257 = vadd.s32 %v251, 768
    %v258 = vadd.s32 %v251, 896
    %v259 = vadd.s32 %v251, 1024
    %v260 = vadd.s32 %v251, 1152
    %vm261 = vcmp.lt.s32.totalorder %v251, 1250
    %vm262 = vcmp.lt.s32.totalorder %v252, 1250
    %vm263 = vcmp.lt.s32.totalorder %v253, 1250
    %vm264 = vcmp.lt.s32.totalorder %v254, 1250
    %vm265 = vcmp.lt.s32.totalorder %v255, 1250
    %vm266 = vcmp.lt.s32.totalorder %v256, 1250
    %vm267 = vcmp.lt.s32.totalorder %v257, 1250
    %vm268 = vcmp.lt.s32.totalorder %v258, 1250
    %vm269 = vcmp.lt.s32.totalorder %v259, 1250
    %vm270 = vcmp.lt.s32.totalorder %v260, 1250
    %v271 = vsel %vm261, 1, 0
    %v272 = vsel %vm262, 1, 0
    %v273 = vsel %vm263, 1, 0
    %v274 = vsel %vm264, 1, 0
    %v275 = vsel %vm265, 1, 0
    %v276 = vsel %vm266, 1, 0
    %v277 = vsel %vm267, 1, 0
    %v278 = vsel %vm268, 1, 0
    %v279 = vsel %vm269, 1, 0
    %v280 = vsel %vm270, 1, 0
    %v281 = vcvt.s32.f32 %v271
    %v282 = vcvt.s32.f32 %v272
    %v283 = vcvt.s32.f32 %v273
    %v284 = vcvt.s32.f32 %v274
    %v285 = vcvt.s32.f32 %v275
    %v286 = vcvt.s32.f32 %v276
    %v287 = vcvt.s32.f32 %v277
    %v288 = vcvt.s32.f32 %v278
    %v289 = vcvt.s32.f32 %v279
    %v290 = vcvt.s32.f32 %v280
    %v291 = vld [vmem:[#allocation11] sm:$0xff]
    %v292 = vld [vmem:[#allocation11 + $0x8] sm:$0xff]
    %v293 = vld [vmem:[#allocation11 + $0x10] sm:$0xff]
    %v294 = vld [vmem:[#allocation11 + $0x18] sm:$0xff]
    %v295 = vld [vmem:[#allocation11 + $0x20] sm:$0xff]
    %v296 = vld [vmem:[#allocation11 + $0x28] sm:$0xff]
    %v297 = vld [vmem:[#allocation11 + $0x30] sm:$0xff]
    %v298 = vld [vmem:[#allocation11 + $0x38] sm:$0xff]
    %v299 = vld [vmem:[#allocation11 + $0x40] sm:$0xff]
    %v300 = vld [vmem:[#allocation11 + $0x48] sm:$0xff]
    %v301 = vld [vmem:[#allocation11 + $0x50] sm:$0xff]
    %v302 = vld [vmem:[#allocation11 + $0x58] sm:$0xff]
    %v303 = vld [vmem:[#allocation11 + $0x60] sm:$0xff]
    %v304 = vld [vmem:[#allocation11 + $0x68] sm:$0xff]
    %v305 = vld [vmem:[#allocation11 + $0x70] sm:$0xff]
    %v306 = vld [vmem:[#allocation11 + $0x78] sm:$0xff]
    %v307 = vld [vmem:[#allocation11 + $0x80] sm:$0xff]
    %v308 = vld [vmem:[#allocation11 + $0x88] sm:$0xff]
    %v309 = vld [vmem:[#allocation11 + $0x90] sm:$0xff]
    %v310 = vld [vmem:[#allocation11 + $0x98] sm:$0xff]
    %v311 = vadd.f32 %v291, %v292
    %v312 = vadd.f32 %v311, %v293
    %v313 = vadd.f32 %v312, %v294
    %v314 = vadd.f32 %v313, %v295
    %v315 = vadd.f32 %v314, %v296
    %v316 = vadd.f32 %v315, %v297
    %v317 = vadd.f32 %v316, %v298
    %v318 = vadd.f32 %v317, %v299
    %v319 = vadd.f32 %v318, %v300
    %320 = vadd.xlane.f32.xlu0 %v319
    %v321 = vpop.xlane.xlu0 %320
    %v322 = vadd.f32 %v301, %v302
    %v323 = vadd.f32 %v322, %v303
    %v324 = vadd.f32 %v323, %v304
    %v325 = vadd.f32 %v324, %v305
    %v326 = vadd.f32 %v325, %v306
    %v327 = vadd.f32 %v326, %v307
    %v328 = vadd.f32 %v327, %v308
    %v329 = vadd.f32 %v328, %v309
    %v330 = vadd.f32 %v329, %v310
    %331 = vadd.xlane.f32.xlu0 %v330
    %v332 = vpop.xlane.xlu0 %331
    %v333 = vadd.f32 %v321, %v332
    %v334 = vrot.slane %v333, 4
    %v335 = vadd.f32 %v333, %v334
    %v336 = vrot.slane %v335, 2
    %v337 = vadd.f32 %v335, %v336
    %v338 = vrot.slane %v337, 1
    %v339 = vadd.f32 %v337, %v338
    %v340 = vmul.f32 %v291, %v291
    %v341 = vmul.f32 %v292, %v292
    %v342 = vmul.f32 %v293, %v293
    %v343 = vmul.f32 %v294, %v294
    %v344 = vmul.f32 %v295, %v295
    %v345 = vmul.f32 %v296, %v296
    %v346 = vmul.f32 %v297, %v297
    %v347 = vmul.f32 %v298, %v298
    %v348 = vmul.f32 %v299, %v299
    %v349 = vmul.f32 %v300, %v300
    %v350 = vmul.f32 %v301, %v301
    %v351 = vmul.f32 %v302, %v302
    %v352 = vmul.f32 %v303, %v303
    %v353 = vmul.f32 %v304, %v304
    %v354 = vmul.f32 %v305, %v305
    %v355 = vmul.f32 %v306, %v306
    %v356 = vmul.f32 %v307, %v307
    %v357 = vmul.f32 %v308, %v308
    %v358 = vmul.f32 %v309, %v309
    %v359 = vmul.f32 %v310, %v310
    %v360 = vadd.f32 %v340, %v341
    %v361 = vadd.f32 %v360, %v342
    %v362 = vadd.f32 %v361, %v343
    %v363 = vadd.f32 %v362, %v344
    %v364 = vadd.f32 %v363, %v345
    %v365 = vadd.f32 %v364, %v346
    %v366 = vadd.f32 %v365, %v347
    %v367 = vadd.f32 %v366, %v348
    %v368 = vadd.f32 %v367, %v349
    %369 = vadd.xlane.f32.xlu0 %v368
    %v370 = vpop.xlane.xlu0 %369
    %v371 = vadd.f32 %v350, %v351
    %v372 = vadd.f32 %v371, %v352
    %v373 = vadd.f32 %v372, %v353
    %v374 = vadd.f32 %v373, %v354
    %v375 = vadd.f32 %v374, %v355
    %v376 = vadd.f32 %v375, %v356
    %v377 = vadd.f32 %v376, %v357
    %v378 = vadd.f32 %v377, %v358
    %v379 = vadd.f32 %v378, %v359
    %380 = vadd.xlane.f32.xlu0 %v379
    %v381 = vpop.xlane.xlu0 %380
    %v382 = vadd.f32 %v370, %v381
    %v383 = vrot.slane %v382, 4
    %v384 = vadd.f32 %v382, %v383
    %v385 = vrot.slane %v384, 2
    %v386 = vadd.f32 %v384, %v385
    %v387 = vrot.slane %v386, 1
    %v388 = vadd.f32 %v386, %v387
    %v389 = vmul.f32 %v339, 5e-05
    %v390 = vmul.f32 %v388, 5e-05
    %v391 = vmul.f32 %v389, %v389
    %v392 = vsub.f32 %v390, %v391
    %v393 = vsub.f32 %v291, %v389
    %v394 = vsub.f32 %v292, %v389
    %v395 = vsub.f32 %v293, %v389
    %v396 = vsub.f32 %v294, %v389
    %v397 = vsub.f32 %v295, %v389
    %v398 = vsub.f32 %v296, %v389
    %v399 = vsub.f32 %v297, %v389
    %v400 = vsub.f32 %v298, %v389
    %v401 = vsub.f32 %v299, %v389
    %v402 = vsub.f32 %v300, %v389
    %v403 = vsub.f32 %v301, %v389
    %v404 = vsub.f32 %v302, %v389
    %v405 = vsub.f32 %v303, %v389
    %v406 = vsub.f32 %v304, %v389
    %v407 = vsub.f32 %v305, %v389
    %v408 = vsub.f32 %v306, %v389
    %v409 = vsub.f32 %v307, %v389
    %v410 = vsub.f32 %v308, %v389
    %v411 = vsub.f32 %v309, %v389
    %v412 = vsub.f32 %v310, %v389
    %413 = vst [vmem:[#allocation2] sm:$0xff] %v393
    %414 = vst [vmem:[#allocation2 + $0x8] sm:$0xff] %v394
    %415 = vst [vmem:[#allocation2 + $0x10] sm:$0xff] %v395
    %416 = vst [vmem:[#allocation2 + $0x18] sm:$0xff] %v396
    %417 = vst [vmem:[#allocation2 + $0x20] sm:$0xff] %v397
    %418 = vst [vmem:[#allocation2 + $0x28] sm:$0xff] %v398
    %419 = vst [vmem:[#allocation2 + $0x30] sm:$0xff] %v399
    %420 = vst [vmem:[#allocation2 + $0x38] sm:$0xff] %v400
    %421 = vst [vmem:[#allocation2 + $0x40] sm:$0xff] %v401
    %422 = vst [vmem:[#allocation2 + $0x48] sm:$0xff] %v402
    %423 = vst [vmem:[#allocation2 + $0x50] sm:$0xff] %v403
    %424 = vst [vmem:[#allocation2 + $0x58] sm:$0xff] %v404
    %425 = vst [vmem:[#allocation2 + $0x60] sm:$0xff] %v405
    %426 = vst [vmem:[#allocation2 + $0x68] sm:$0xff] %v406
    %427 = vst [vmem:[#allocation2 + $0x70] sm:$0xff] %v407
    %428 = vst [vmem:[#allocation2 + $0x78] sm:$0xff] %v408
    %429 = vst [vmem:[#allocation2 + $0x80] sm:$0xff] %v409
    %430 = vst [vmem:[#allocation2 + $0x88] sm:$0xff] %v410
    %431 = vst [vmem:[#allocation2 + $0x90] sm:$0xff] %v411
    %432 = vst [vmem:[#allocation2 + $0x98] sm:$0xff] %v412
    %s433 = sld [smem:[#allocation9]]
    %s434 = smul.f32 %s433, %s433
    %v435 = vstv %s434
    %v436 = vmul.f32 %v435, %v392
    %v437 = vadd.f32 %v436, 1e-05
    %v438 = vrsqrt.pop %v437
    %v439 = vmul.f32 %v438, %v437
    %v440 = vmul.f32 %v439, %v438
    %v441 = vmul.f32 0.5, %v440
    %v442 = vsub.f32 1.5, %v441
    %v443 = vmul.f32 %v438, %v442
    %vm444 = vweird.f32 %v437
    %vm445 = vweird.f32 %v438
    %vm446 = vmor %vm444, %vm445
    %v447 = vsel %vm446, %v438, %v443
    %v448 = vstv %s433
    %v449 = vmul.f32 %v448, %v447
    %v450 = vld [vmem:[#allocation2] sm:$0xff]
    %v451 = vld [vmem:[#allocation2 + $0x8] sm:$0xff]
    %v452 = vld [vmem:[#allocation2 + $0x10] sm:$0xff]
    %v453 = vld [vmem:[#allocation2 + $0x18] sm:$0xff]
    %v454 = vld [vmem:[#allocation2 + $0x20] sm:$0xff]
    %v455 = vld [vmem:[#allocation2 + $0x28] sm:$0xff]
    %v456 = vld [vmem:[#allocation2 + $0x30] sm:$0xff]
    %v457 = vld [vmem:[#allocation2 + $0x38] sm:$0xff]
    %v458 = vld [vmem:[#allocation2 + $0x40] sm:$0xff]
    %v459 = vld [vmem:[#allocation2 + $0x48] sm:$0xff]
    %v460 = vld [vmem:[#allocation2 + $0x50] sm:$0xff]
    %v461 = vld [vmem:[#allocation2 + $0x58] sm:$0xff]
    %v462 = vld [vmem:[#allocation2 + $0x60] sm:$0xff]
    %v463 = vld [vmem:[#allocation2 + $0x68] sm:$0xff]
    %v464 = vld [vmem:[#allocation2 + $0x70] sm:$0xff]
    %v465 = vld [vmem:[#allocation2 + $0x78] sm:$0xff]
    %v466 = vld [vmem:[#allocation2 + $0x80] sm:$0xff]
    %v467 = vld [vmem:[#allocation2 + $0x88] sm:$0xff]
    %v468 = vld [vmem:[#allocation2 + $0x90] sm:$0xff]
    %v469 = vld [vmem:[#allocation2 + $0x98] sm:$0xff]
    %v470 = vmul.f32 %v450, %v449
    %v471 = vmul.f32 %v451, %v449
    %v472 = vmul.f32 %v452, %v449
    %v473 = vmul.f32 %v453, %v449
    %v474 = vmul.f32 %v454, %v449
    %v475 = vmul.f32 %v455, %v449
    %v476 = vmul.f32 %v456, %v449
    %v477 = vmul.f32 %v457, %v449
    %v478 = vmul.f32 %v458, %v449
    %v479 = vmul.f32 %v459, %v449
    %v480 = vmul.f32 %v460, %v449
    %v481 = vmul.f32 %v461, %v449
    %v482 = vmul.f32 %v462, %v449
    %v483 = vmul.f32 %v463, %v449
    %v484 = vmul.f32 %v464, %v449
    %v485 = vmul.f32 %v465, %v449
    %v486 = vmul.f32 %v466, %v449
    %v487 = vmul.f32 %v467, %v449
    %v488 = vmul.f32 %v468, %v449
    %v489 = vmul.f32 %v469, %v449
    %vm490 = vcmp.ge.f32.partialorder %v470, 0.0
    %vm491 = vcmp.ge.f32.partialorder %v471, 0.0
    %vm492 = vcmp.ge.f32.partialorder %v472, 0.0
    %vm493 = vcmp.ge.f32.partialorder %v473, 0.0
    %vm494 = vcmp.ge.f32.partialorder %v474, 0.0
    %vm495 = vcmp.ge.f32.partialorder %v475, 0.0
    %vm496 = vcmp.ge.f32.partialorder %v476, 0.0
    %vm497 = vcmp.ge.f32.partialorder %v477, 0.0
    %vm498 = vcmp.ge.f32.partialorder %v478, 0.0
    %vm499 = vcmp.ge.f32.partialorder %v479, 0.0
    %vm500 = vcmp.ge.f32.partialorder %v480, 0.0
    %vm501 = vcmp.ge.f32.partialorder %v481, 0.0
    %vm502 = vcmp.ge.f32.partialorder %v482, 0.0
    %vm503 = vcmp.ge.f32.partialorder %v483, 0.0
    %vm504 = vcmp.ge.f32.partialorder %v484, 0.0
    %vm505 = vcmp.ge.f32.partialorder %v485, 0.0
    %vm506 = vcmp.ge.f32.partialorder %v486, 0.0
    %vm507 = vcmp.ge.f32.partialorder %v487, 0.0
    %vm508 = vcmp.ge.f32.partialorder %v488, 0.0
    %vm509 = vcmp.ge.f32.partialorder %v489, 0.0
    %v510 = vmul.f32 %v470, 0.01
    %v511 = vmul.f32 %v471, 0.01
    %v512 = vmul.f32 %v472, 0.01
    %v513 = vmul.f32 %v473, 0.01
    %v514 = vmul.f32 %v474, 0.01
    %v515 = vmul.f32 %v475, 0.01
    %v516 = vmul.f32 %v476, 0.01
    %v517 = vmul.f32 %v477, 0.01
    %v518 = vmul.f32 %v478, 0.01
    %v519 = vmul.f32 %v479, 0.01
    %v520 = vmul.f32 %v480, 0.01
    %v521 = vmul.f32 %v481, 0.01
    %v522 = vmul.f32 %v482, 0.01
    %v523 = vmul.f32 %v483, 0.01
    %v524 = vmul.f32 %v484, 0.01
    %v525 = vmul.f32 %v485, 0.01
    %v526 = vmul.f32 %v486, 0.01
    %v527 = vmul.f32 %v487, 0.01
    %v528 = vmul.f32 %v488, 0.01
    %v529 = vmul.f32 %v489, 0.01
    %v530 = vsel %vm490, %v470, %v510
    %v531 = vsel %vm491, %v471, %v511
    %v532 = vsel %vm492, %v472, %v512
    %v533 = vsel %vm493, %v473, %v513
    %v534 = vsel %vm494, %v474, %v514
    %v535 = vsel %vm495, %v475, %v515
    %v536 = vsel %vm496, %v476, %v516
    %v537 = vsel %vm497, %v477, %v517
    %v538 = vsel %vm498, %v478, %v518
    %v539 = vsel %vm499, %v479, %v519
    %v540 = vsel %vm500, %v480, %v520
    %v541 = vsel %vm501, %v481, %v521
    %v542 = vsel %vm502, %v482, %v522
    %v543 = vsel %vm503, %v483, %v523
    %v544 = vsel %vm504, %v484, %v524
    %v545 = vsel %vm505, %v485, %v525
    %v546 = vsel %vm506, %v486, %v526
    %v547 = vsel %vm507, %v487, %v527
    %v548 = vsel %vm508, %v488, %v528
    %v549 = vsel %vm509, %v489, %v529
    %550 = vst [vmem:[#allocation3] sm:$0xff] %v530
    %551 = vst [vmem:[#allocation3 + $0x8] sm:$0xff] %v531
    %552 = vst [vmem:[#allocation3 + $0x10] sm:$0xff] %v532
    %553 = vst [vmem:[#allocation3 + $0x18] sm:$0xff] %v533
    %554 = vst [vmem:[#allocation3 + $0x20] sm:$0xff] %v534
    %555 = vst [vmem:[#allocation3 + $0x28] sm:$0xff] %v535
    %556 = vst [vmem:[#allocation3 + $0x30] sm:$0xff] %v536
    %557 = vst [vmem:[#allocation3 + $0x38] sm:$0xff] %v537
    %558 = vst [vmem:[#allocation3 + $0x40] sm:$0xff] %v538
    %559 = vst [vmem:[#allocation3 + $0x48] sm:$0xff] %v539
    %560 = vst [vmem:[#allocation3 + $0x50] sm:$0xff] %v540
    %561 = vst [vmem:[#allocation3 + $0x58] sm:$0xff] %v541
    %562 = vst [vmem:[#allocation3 + $0x60] sm:$0xff] %v542
    %563 = vst [vmem:[#allocation3 + $0x68] sm:$0xff] %v543
    %564 = vst [vmem:[#allocation3 + $0x70] sm:$0xff] %v544
    %565 = vst [vmem:[#allocation3 + $0x78] sm:$0xff] %v545
    %566 = vst [vmem:[#allocation3 + $0x80] sm:$0xff] %v546
    %567 = vst [vmem:[#allocation3 + $0x88] sm:$0xff] %v547
    %568 = vst [vmem:[#allocation3 + $0x90] sm:$0xff] %v548
    %569 = vst [vmem:[#allocation3 + $0x98] sm:$0xff] %v549
    %s570 = sld [smem:[#allocation9 + $0x1]]
    %s571 = smul.f32 %s570, %s570
    %v572 = vstv %s571
    %v573 = vmul.f32 %v572, %v392
    %v574 = vadd.f32 %v573, 1e-05
    %v575 = vrsqrt.pop %v574
    %v576 = vmul.f32 %v575, %v574
    %v577 = vmul.f32 %v576, %v575
    %v578 = vmul.f32 0.5, %v577
    %v579 = vsub.f32 1.5, %v578
    %v580 = vmul.f32 %v575, %v579
    %vm581 = vweird.f32 %v574
    %vm582 = vweird.f32 %v575
    %vm583 = vmor %vm581, %vm582
    %v584 = vsel %vm583, %v575, %v580
    %v585 = vstv %s570
    %v586 = vmul.f32 %v585, %v584
    %v587 = vld [vmem:[#allocation2] sm:$0xff]
    %v588 = vld [vmem:[#allocation2 + $0x8] sm:$0xff]
    %v589 = vld [vmem:[#allocation2 + $0x10] sm:$0xff]
    %v590 = vld [vmem:[#allocation2 + $0x18] sm:$0xff]
    %v591 = vld [vmem:[#allocation2 + $0x20] sm:$0xff]
    %v592 = vld [vmem:[#allocation2 + $0x28] sm:$0xff]
    %v593 = vld [vmem:[#allocation2 + $0x30] sm:$0xff]
    %v594 = vld [vmem:[#allocation2 + $0x38] sm:$0xff]
    %v595 = vld [vmem:[#allocation2 + $0x40] sm:$0xff]
    %v596 = vld [vmem:[#allocation2 + $0x48] sm:$0xff]
    %v597 = vld [vmem:[#allocation2 + $0x50] sm:$0xff]
    %v598 = vld [vmem:[#allocation2 + $0x58] sm:$0xff]
    %v599 = vld [vmem:[#allocation2 + $0x60] sm:$0xff]
    %v600 = vld [vmem:[#allocation2 + $0x68] sm:$0xff]
    %v601 = vld [vmem:[#allocation2 + $0x70] sm:$0xff]
    %v602 = vld [vmem:[#allocation2 + $0x78] sm:$0xff]
    %v603 = vld [vmem:[#allocation2 + $0x80] sm:$0xff]
    %v604 = vld [vmem:[#allocation2 + $0x88] sm:$0xff]
    %v605 = vld [vmem:[#allocation2 + $0x90] sm:$0xff]
    %v606 = vld [vmem:[#allocation2 + $0x98] sm:$0xff]
    %v607 = vmul.f32 %v587, %v586
    %v608 = vmul.f32 %v588, %v586
    %v609 = vmul.f32 %v589, %v586
    %v610 = vmul.f32 %v590, %v586
    %v611 = vmul.f32 %v591, %v586
    %v612 = vmul.f32 %v592, %v586
    %v613 = vmul.f32 %v593, %v586
    %v614 = vmul.f32 %v594, %v586
    %v615 = vmul.f32 %v595, %v586
    %v616 = vmul.f32 %v596, %v586
    %v617 = vmul.f32 %v597, %v586
    %v618 = vmul.f32 %v598, %v586
    %v619 = vmul.f32 %v599, %v586
    %v620 = vmul.f32 %v600, %v586
    %v621 = vmul.f32 %v601, %v586
    %v622 = vmul.f32 %v602, %v586
    %v623 = vmul.f32 %v603, %v586
    %v624 = vmul.f32 %v604, %v586
    %v625 = vmul.f32 %v605, %v586
    %v626 = vmul.f32 %v606, %v586
    %vm627 = vcmp.ge.f32.partialorder %v607, 0.0
    %vm628 = vcmp.ge.f32.partialorder %v608, 0.0
    %vm629 = vcmp.ge.f32.partialorder %v609, 0.0
    %vm630 = vcmp.ge.f32.partialorder %v610, 0.0
    %vm631 = vcmp.ge.f32.partialorder %v611, 0.0
    %vm632 = vcmp.ge.f32.partialorder %v612, 0.0
    %vm633 = vcmp.ge.f32.partialorder %v613, 0.0
    %vm634 = vcmp.ge.f32.partialorder %v614, 0.0
    %vm635 = vcmp.ge.f32.partialorder %v615, 0.0
    %vm636 = vcmp.ge.f32.partialorder %v616, 0.0
    %vm637 = vcmp.ge.f32.partialorder %v617, 0.0
    %vm638 = vcmp.ge.f32.partialorder %v618, 0.0
    %vm639 = vcmp.ge.f32.partialorder %v619, 0.0
    %vm640 = vcmp.ge.f32.partialorder %v620, 0.0
    %vm641 = vcmp.ge.f32.partialorder %v621, 0.0
    %vm642 = vcmp.ge.f32.partialorder %v622, 0.0
    %vm643 = vcmp.ge.f32.partialorder %v623, 0.0
    %vm644 = vcmp.ge.f32.partialorder %v624, 0.0
    %vm645 = vcmp.ge.f32.partialorder %v625, 0.0
    %vm646 = vcmp.ge.f32.partialorder %v626, 0.0
    %v647 = vmul.f32 %v607, 0.01
    %v648 = vmul.f32 %v608, 0.01
    %v649 = vmul.f32 %v609, 0.01
    %v650 = vmul.f32 %v610, 0.01
    %v651 = vmul.f32 %v611, 0.01
    %v652 = vmul.f32 %v612, 0.01
    %v653 = vmul.f32 %v613, 0.01
    %v654 = vmul.f32 %v614, 0.01
    %v655 = vmul.f32 %v615, 0.01
    %v656 = vmul.f32 %v616, 0.01
    %v657 = vmul.f32 %v617, 0.01
    %v658 = vmul.f32 %v618, 0.01
    %v659 = vmul.f32 %v619, 0.01
    %v660 = vmul.f32 %v620, 0.01
    %v661 = vmul.f32 %v621, 0.01
    %v662 = vmul.f32 %v622, 0.01
    %v663 = vmul.f32 %v623, 0.01
    %v664 = vmul.f32 %v624, 0.01
    %v665 = vmul.f32 %v625, 0.01
    %v666 = vmul.f32 %v626, 0.01
    %v667 = vsel %vm627, %v607, %v647
    %v668 = vsel %vm628, %v608, %v648
    %v669 = vsel %vm629, %v609, %v649
    %v670 = vsel %vm630, %v610, %v650
    %v671 = vsel %vm631, %v611, %v651
    %v672 = vsel %vm632, %v612, %v652
    %v673 = vsel %vm633, %v613, %v653
    %v674 = vsel %vm634, %v614, %v654
    %v675 = vsel %vm635, %v615, %v655
    %v676 = vsel %vm636, %v616, %v656
    %v677 = vsel %vm637, %v617, %v657
    %v678 = vsel %vm638, %v618, %v658
    %v679 = vsel %vm639, %v619, %v659
    %v680 = vsel %vm640, %v620, %v660
    %v681 = vsel %vm641, %v621, %v661
    %v682 = vsel %vm642, %v622, %v662
    %v683 = vsel %vm643, %v623, %v663
    %v684 = vsel %vm644, %v624, %v664
    %v685 = vsel %vm645, %v625, %v665
    %v686 = vsel %vm646, %v626, %v666
    %687 = vst [vmem:[#allocation3 + $0xa0] sm:$0xff] %v667
    %688 = vst [vmem:[#allocation3 + $0xa8] sm:$0xff] %v668
    %689 = vst [vmem:[#allocation3 + $0xb0] sm:$0xff] %v669
    %690 = vst [vmem:[#allocation3 + $0xb8] sm:$0xff] %v670
    %691 = vst [vmem:[#allocation3 + $0xc0] sm:$0xff] %v671
    %692 = vst [vmem:[#allocation3 + $0xc8] sm:$0xff] %v672
    %693 = vst [vmem:[#allocation3 + $0xd0] sm:$0xff] %v673
    %694 = vst [vmem:[#allocation3 + $0xd8] sm:$0xff] %v674
    %695 = vst [vmem:[#allocation3 + $0xe0] sm:$0xff] %v675
    %696 = vst [vmem:[#allocation3 + $0xe8] sm:$0xff] %v676
    %697 = vst [vmem:[#allocation3 + $0xf0] sm:$0xff] %v677
    %698 = vst [vmem:[#allocation3 + $0xf8] sm:$0xff] %v678
    %699 = vst [vmem:[#allocation3 + $0x100] sm:$0xff] %v679
    %700 = vst [vmem:[#allocation3 + $0x108] sm:$0xff] %v680
    %701 = vst [vmem:[#allocation3 + $0x110] sm:$0xff] %v681
    %702 = vst [vmem:[#allocation3 + $0x118] sm:$0xff] %v682
    %703 = vst [vmem:[#allocation3 + $0x120] sm:$0xff] %v683
    %704 = vst [vmem:[#allocation3 + $0x128] sm:$0xff] %v684
    %705 = vst [vmem:[#allocation3 + $0x130] sm:$0xff] %v685
    %706 = vst [vmem:[#allocation3 + $0x138] sm:$0xff] %v686
    %s707 = sld [smem:[#allocation9 + $0x2]]
    %s708 = smul.f32 %s707, %s707
    %v709 = vstv %s708
    %v710 = vmul.f32 %v709, %v392
    %v711 = vadd.f32 %v710, 1e-05
    %v712 = vrsqrt.pop %v711
    %v713 = vmul.f32 %v712, %v711
    %v714 = vmul.f32 %v713, %v712
    %v715 = vmul.f32 0.5, %v714
    %v716 = vsub.f32 1.5, %v715
    %v717 = vmul.f32 %v712, %v716
    %vm718 = vweird.f32 %v711
    %vm719 = vweird.f32 %v712
    %vm720 = vmor %vm718, %vm719
    %v721 = vsel %vm720, %v712, %v717
    %v722 = vstv %s707
    %v723 = vmul.f32 %v722, %v721
    %v724 = vld [vmem:[#allocation2] sm:$0xff]
    %v725 = vld [vmem:[#allocation2 + $0x8] sm:$0xff]
    %v726 = vld [vmem:[#allocation2 + $0x10] sm:$0xff]
    %v727 = vld [vmem:[#allocation2 + $0x18] sm:$0xff]
    %v728 = vld [vmem:[#allocation2 + $0x20] sm:$0xff]
    %v729 = vld [vmem:[#allocation2 + $0x28] sm:$0xff]
    %v730 = vld [vmem:[#allocation2 + $0x30] sm:$0xff]
    %v731 = vld [vmem:[#allocation2 + $0x38] sm:$0xff]
    %v732 = vld [vmem:[#allocation2 + $0x40] sm:$0xff]
    %v733 = vld [vmem:[#allocation2 + $0x48] sm:$0xff]
    %v734 = vld [vmem:[#allocation2 + $0x50] sm:$0xff]
    %v735 = vld [vmem:[#allocation2 + $0x58] sm:$0xff]
    %v736 = vld [vmem:[#allocation2 + $0x60] sm:$0xff]
    %v737 = vld [vmem:[#allocation2 + $0x68] sm:$0xff]
    %v738 = vld [vmem:[#allocation2 + $0x70] sm:$0xff]
    %v739 = vld [vmem:[#allocation2 + $0x78] sm:$0xff]
    %v740 = vld [vmem:[#allocation2 + $0x80] sm:$0xff]
    %v741 = vld [vmem:[#allocation2 + $0x88] sm:$0xff]
    %v742 = vld [vmem:[#allocation2 + $0x90] sm:$0xff]
    %v743 = vld [vmem:[#allocation2 + $0x98] sm:$0xff]
    %v744 = vmul.f32 %v724, %v723
    %v745 = vmul.f32 %v725, %v723
    %v746 = vmul.f32 %v726, %v723
    %v747 = vmul.f32 %v727, %v723
    %v748 = vmul.f32 %v728, %v723
    %v749 = vmul.f32 %v729, %v723
    %v750 = vmul.f32 %v730, %v723
    %v751 = vmul.f32 %v731, %v723
    %v752 = vmul.f32 %v732, %v723
    %v753 = vmul.f32 %v733, %v723
    %v754 = vmul.f32 %v734, %v723
    %v755 = vmul.f32 %v735, %v723
    %v756 = vmul.f32 %v736, %v723
    %v757 = vmul.f32 %v737, %v723
    %v758 = vmul.f32 %v738, %v723
    %v759 = vmul.f32 %v739, %v723
    %v760 = vmul.f32 %v740, %v723
    %v761 = vmul.f32 %v741, %v723
    %v762 = vmul.f32 %v742, %v723
    %v763 = vmul.f32 %v743, %v723
    %vm764 = vcmp.ge.f32.partialorder %v744, 0.0
    %vm765 = vcmp.ge.f32.partialorder %v745, 0.0
    %vm766 = vcmp.ge.f32.partialorder %v746, 0.0
    %vm767 = vcmp.ge.f32.partialorder %v747, 0.0
    %vm768 = vcmp.ge.f32.partialorder %v748, 0.0
    %vm769 = vcmp.ge.f32.partialorder %v749, 0.0
    %vm770 = vcmp.ge.f32.partialorder %v750, 0.0
    %vm771 = vcmp.ge.f32.partialorder %v751, 0.0
    %vm772 = vcmp.ge.f32.partialorder %v752, 0.0
    %vm773 = vcmp.ge.f32.partialorder %v753, 0.0
    %vm774 = vcmp.ge.f32.partialorder %v754, 0.0
    %vm775 = vcmp.ge.f32.partialorder %v755, 0.0
    %vm776 = vcmp.ge.f32.partialorder %v756, 0.0
    %vm777 = vcmp.ge.f32.partialorder %v757, 0.0
    %vm778 = vcmp.ge.f32.partialorder %v758, 0.0
    %vm779 = vcmp.ge.f32.partialorder %v759, 0.0
    %vm780 = vcmp.ge.f32.partialorder %v760, 0.0
    %vm781 = vcmp.ge.f32.partialorder %v761, 0.0
    %vm782 = vcmp.ge.f32.partialorder %v762, 0.0
    %vm783 = vcmp.ge.f32.partialorder %v763, 0.0
    %v784 = vmul.f32 %v744, 0.01
    %v785 = vmul.f32 %v745, 0.01
    %v786 = vmul.f32 %v746, 0.01
    %v787 = vmul.f32 %v747, 0.01
    %v788 = vmul.f32 %v748, 0.01
    %v789 = vmul.f32 %v749, 0.01
    %v790 = vmul.f32 %v750, 0.01
    %v791 = vmul.f32 %v751, 0.01
    %v792 = vmul.f32 %v752, 0.01
    %v793 = vmul.f32 %v753, 0.01
    %v794 = vmul.f32 %v754, 0.01
    %v795 = vmul.f32 %v755, 0.01
    %v796 = vmul.f32 %v756, 0.01
    %v797 = vmul.f32 %v757, 0.01
    %v798 = vmul.f32 %v758, 0.01
    %v799 = vmul.f32 %v759, 0.01
    %v800 = vmul.f32 %v760, 0.01
    %v801 = vmul.f32 %v761, 0.01
    %v802 = vmul.f32 %v762, 0.01
    %v803 = vmul.f32 %v763, 0.01
    %v804 = vsel %vm764, %v744, %v784
    %v805 = vsel %vm765, %v745, %v785
    %v806 = vsel %vm766, %v746, %v786
    %v807 = vsel %vm767, %v747, %v787
    %v808 = vsel %vm768, %v748, %v788
    %v809 = vsel %vm769, %v749, %v789
    %v810 = vsel %vm770, %v750, %v790
    %v811 = vsel %vm771, %v751, %v791
    %v812 = vsel %vm772, %v752, %v792
    %v813 = vsel %vm773, %v753, %v793
    %v814 = vsel %vm774, %v754, %v794
    %v815 = vsel %vm775, %v755, %v795
    %v816 = vsel %vm776, %v756, %v796
    %v817 = vsel %vm777, %v757, %v797
    %v818 = vsel %vm778, %v758, %v798
    %v819 = vsel %vm779, %v759, %v799
    %v820 = vsel %vm780, %v760, %v800
    %v821 = vsel %vm781, %v761, %v801
    %v822 = vsel %vm782, %v762, %v802
    %v823 = vsel %vm783, %v763, %v803
    %824 = vst [vmem:[#allocation3 + $0x140] sm:$0xff] %v804
    %825 = vst [vmem:[#allocation3 + $0x148] sm:$0xff] %v805
    %826 = vst [vmem:[#allocation3 + $0x150] sm:$0xff] %v806
    %827 = vst [vmem:[#allocation3 + $0x158] sm:$0xff] %v807
    %828 = vst [vmem:[#allocation3 + $0x160] sm:$0xff] %v808
    %829 = vst [vmem:[#allocation3 + $0x168] sm:$0xff] %v809
    %830 = vst [vmem:[#allocation3 + $0x170] sm:$0xff] %v810
    %831 = vst [vmem:[#allocation3 + $0x178] sm:$0xff] %v811
    %832 = vst [vmem:[#allocation3 + $0x180] sm:$0xff] %v812
    %833 = vst [vmem:[#allocation3 + $0x188] sm:$0xff] %v813
    %834 = vst [vmem:[#allocation3 + $0x190] sm:$0xff] %v814
    %835 = vst [vmem:[#allocation3 + $0x198] sm:$0xff] %v815
    %836 = vst [vmem:[#allocation3 + $0x1a0] sm:$0xff] %v816
    %837 = vst [vmem:[#allocation3 + $0x1a8] sm:$0xff] %v817
    %838 = vst [vmem:[#allocation3 + $0x1b0] sm:$0xff] %v818
    %839 = vst [vmem:[#allocation3 + $0x1b8] sm:$0xff] %v819
    %840 = vst [vmem:[#allocation3 + $0x1c0] sm:$0xff] %v820
    %841 = vst [vmem:[#allocation3 + $0x1c8] sm:$0xff] %v821
    %842 = vst [vmem:[#allocation3 + $0x1d0] sm:$0xff] %v822
    %843 = vst [vmem:[#allocation3 + $0x1d8] sm:$0xff] %v823
    %v844 = vld [vmem:[%s1] sm:$0x3f]
    %v845 = vld [vmem:[#allocation3] sm:$0xff]
    %v846 = vld [vmem:[#allocation3 + $0x8] sm:$0xff]
    %v847 = vld [vmem:[#allocation3 + $0x10] sm:$0xff]
    %v848 = vld [vmem:[#allocation3 + $0x18] sm:$0xff]
    %v849 = vld [vmem:[#allocation3 + $0x20] sm:$0xff]
    %v850 = vld [vmem:[#allocation3 + $0x28] sm:$0xff]
    %v851 = vld [vmem:[#allocation3 + $0x30] sm:$0xff]
    %v852 = vld [vmem:[#allocation3 + $0x38] sm:$0xff]
    %v853 = vld [vmem:[#allocation3 + $0x40] sm:$0xff]
    %v854 = vld [vmem:[#allocation3 + $0x48] sm:$0xff]
    %v855 = vld [vmem:[#allocation3 + $0x50] sm:$0xff]
    %v856 = vld [vmem:[#allocation3 + $0x58] sm:$0xff]
    %v857 = vld [vmem:[#allocation3 + $0x60] sm:$0xff]
    %v858 = vld [vmem:[#allocation3 + $0x68] sm:$0xff]
    %v859 = vld [vmem:[#allocation3 + $0x70] sm:$0xff]
    %v860 = vld [vmem:[#allocation3 + $0x78] sm:$0xff]
    %v861 = vld [vmem:[#allocation3 + $0x80] sm:$0xff]
    %v862 = vld [vmem:[#allocation3 + $0x88] sm:$0xff]
    %v863 = vld [vmem:[#allocation3 + $0x90] sm:$0xff]
    %v864 = vld [vmem:[#allocation3 + $0x98] sm:$0xff]
    %v865 = vld [vmem:[#allocation3 + $0xa0] sm:$0xff]
    %v866 = vld [vmem:[#allocation3 + $0xa8] sm:$0xff]
    %v867 = vld [vmem:[#allocation3 + $0xb0] sm:$0xff]
    %v868 = vld [vmem:[#allocation3 + $0xb8] sm:$0xff]
    %v869 = vld [vmem:[#allocation3 + $0xc0] sm:$0xff]
    %v870 = vld [vmem:[#allocation3 + $0xc8] sm:$0xff]
    %v871 = vld [vmem:[#allocation3 + $0xd0] sm:$0xff]
    %v872 = vld [vmem:[#allocation3 + $0xd8] sm:$0xff]
    %v873 = vld [vmem:[#allocation3 + $0xe0] sm:$0xff]
    %v874 = vld [vmem:[#allocation3 + $0xe8] sm:$0xff]
    %v875 = vld [vmem:[#allocation3 + $0xf0] sm:$0xff]
    %v876 = vld [vmem:[#allocation3 + $0xf8] sm:$0xff]
    %v877 = vld [vmem:[#allocation3 + $0x100] sm:$0xff]
    %v878 = vld [vmem:[#allocation3 + $0x108] sm:$0xff]
    %v879 = vld [vmem:[#allocation3 + $0x110] sm:$0xff]
    %v880 = vld [vmem:[#allocation3 + $0x118] sm:$0xff]
    %v881 = vld [vmem:[#allocation3 + $0x120] sm:$0xff]
    %v882 = vld [vmem:[#allocation3 + $0x128] sm:$0xff]
    %v883 = vld [vmem:[#allocation3 + $0x130] sm:$0xff]
    %v884 = vld [vmem:[#allocation3 + $0x138] sm:$0xff]
    %v885 = vld [vmem:[#allocation3 + $0x140] sm:$0xff]
    %v886 = vld [vmem:[#allocation3 + $0x148] sm:$0xff]
    %v887 = vld [vmem:[#allocation3 + $0x150] sm:$0xff]
    %v888 = vld [vmem:[#allocation3 + $0x158] sm:$0xff]
    %v889 = vld [vmem:[#allocation3 + $0x160] sm:$0xff]
    %v890 = vld [vmem:[#allocation3 + $0x168] sm:$0xff]
    %v891 = vld [vmem:[#allocation3 + $0x170] sm:$0xff]
    %v892 = vld [vmem:[#allocation3 + $0x178] sm:$0xff]
    %v893 = vld [vmem:[#allocation3 + $0x180] sm:$0xff]
    %v894 = vld [vmem:[#allocation3 + $0x188] sm:$0xff]
    %v895 = vld [vmem:[#allocation3 + $0x190] sm:$0xff]
    %v896 = vld [vmem:[#allocation3 + $0x198] sm:$0xff]
    %v897 = vld [vmem:[#allocation3 + $0x1a0] sm:$0xff]
    %v898 = vld [vmem:[#allocation3 + $0x1a8] sm:$0xff]
    %v899 = vld [vmem:[#allocation3 + $0x1b0] sm:$0xff]
    %v900 = vld [vmem:[#allocation3 + $0x1b8] sm:$0xff]
    %v901 = vld [vmem:[#allocation3 + $0x1c0] sm:$0xff]
    %v902 = vld [vmem:[#allocation3 + $0x1c8] sm:$0xff]
    %v903 = vld [vmem:[#allocation3 + $0x1d0] sm:$0xff]
    %v904 = vld [vmem:[#allocation3 + $0x1d8] sm:$0xff]
    %vm905 = vcmask 392192
    %v907 = vsel %vm905, %v844, 0
    %909 = vmatpush.msra.mxu0 0.0
    %910 = vmatpush.msra.mxu0 0.0
    %911 = vmatpush.msra.mxu0 0.0
    %912 = vmatpush.msra.mxu0 0.0
    %913 = vmatpush.msra.mxu0 0.0
    %914 = vmatpush.msra.mxu0 0.0
    %915 = vmatpush.msra.mxu0 0.0
    %916 = vmatpush.msra.mxu0 0.0
    %917 = vmatpush.msra.mxu0 0.0
    %918 = vmatpush.msra.mxu0 0.0
    %919 = vmatpush.msra.mxu0 %v895
    %920 = vmatpush.msra.mxu0 %v885
    %921 = vmatpush.msra.mxu0 %v875
    %922 = vmatpush.msra.mxu0 %v865
    %923 = vmatpush.msra.mxu0 %v855
    %924 = vmatpush.msra.mxu0 %v845
    %925 = vmatmul.f32.gmra.mxu0 %v907
    %v926 = vpop.f32.mrf.mxu0
    %v927 = vadd.f32 0.0, %v926
    %928 = vdwg.mxu0
    %929 = vmatpush.msra.mxu0 0.0
    %930 = vmatpush.msra.mxu0 0.0
    %931 = vmatpush.msra.mxu0 0.0
    %932 = vmatpush.msra.mxu0 0.0
    %933 = vmatpush.msra.mxu0 0.0
    %934 = vmatpush.msra.mxu0 0.0
    %935 = vmatpush.msra.mxu0 0.0
    %936 = vmatpush.msra.mxu0 0.0
    %937 = vmatpush.msra.mxu0 0.0
    %938 = vmatpush.msra.mxu0 0.0
    %939 = vmatpush.msra.mxu0 %v896
    %940 = vmatpush.msra.mxu0 %v886
    %941 = vmatpush.msra.mxu0 %v876
    %942 = vmatpush.msra.mxu0 %v866
    %943 = vmatpush.msra.mxu0 %v856
    %944 = vmatpush.msra.mxu0 %v846
    %945 = vmatmul.f32.gmra.mxu0 %v907
    %v946 = vpop.f32.mrf.mxu0
    %v947 = vadd.f32 0.0, %v946
    %948 = vdwg.mxu0
    %949 = vmatpush.msra.mxu0 0.0
    %950 = vmatpush.msra.mxu0 0.0
    %951 = vmatpush.msra.mxu0 0.0
    %952 = vmatpush.msra.mxu0 0.0
    %953 = vmatpush.msra.mxu0 0.0
    %954 = vmatpush.msra.mxu0 0.0
    %955 = vmatpush.msra.mxu0 0.0
    %956 = vmatpush.msra.mxu0 0.0
    %957 = vmatpush.msra.mxu0 0.0
    %958 = vmatpush.msra.mxu0 0.0
    %959 = vmatpush.msra.mxu0 %v897
    %960 = vmatpush.msra.mxu0 %v887
    %961 = vmatpush.msra.mxu0 %v877
    %962 = vmatpush.msra.mxu0 %v867
    %963 = vmatpush.msra.mxu0 %v857
    %964 = vmatpush.msra.mxu0 %v847
    %965 = vmatmul.f32.gmra.mxu0 %v907
    %v966 = vpop.f32.mrf.mxu0
    %v967 = vadd.f32 0.0, %v966
    %968 = vdwg.mxu0
    %969 = vmatpush.msra.mxu0 0.0
    %970 = vmatpush.msra.mxu0 0.0
    %971 = vmatpush.msra.mxu0 0.0
    %972 = vmatpush.msra.mxu0 0.0
    %973 = vmatpush.msra.mxu0 0.0
    %974 = vmatpush.msra.mxu0 0.0
    %975 = vmatpush.msra.mxu0 0.0
    %976 = vmatpush.msra.mxu0 0.0
    %977 = vmatpush.msra.mxu0 0.0
    %978 = vmatpush.msra.mxu0 0.0
    %979 = vmatpush.msra.mxu0 %v898
    %980 = vmatpush.msra.mxu0 %v888
    %981 = vmatpush.msra.mxu0 %v878
    %982 = vmatpush.msra.mxu0 %v868
    %983 = vmatpush.msra.mxu0 %v858
    %984 = vmatpush.msra.mxu0 %v848
    %985 = vmatmul.f32.gmra.mxu0 %v907
    %v986 = vpop.f32.mrf.mxu0
    %v987 = vadd.f32 0.0, %v986
    %988 = vdwg.mxu0
    %989 = vmatpush.msra.mxu0 0.0
    %990 = vmatpush.msra.mxu0 0.0
    %991 = vmatpush.msra.mxu0 0.0
    %992 = vmatpush.msra.mxu0 0.0
    %993 = vmatpush.msra.mxu0 0.0
    %994 = vmatpush.msra.mxu0 0.0
    %995 = vmatpush.msra.mxu0 0.0
    %996 = vmatpush.msra.mxu0 0.0
    %997 = vmatpush.msra.mxu0 0.0
    %998 = vmatpush.msra.mxu0 0.0
    %999 = vmatpush.msra.mxu0 %v899
    %1000 = vmatpush.msra.mxu0 %v889
    %1001 = vmatpush.msra.mxu0 %v879
    %1002 = vmatpush.msra.mxu0 %v869
    %1003 = vmatpush.msra.mxu0 %v859
    %1004 = vmatpush.msra.mxu0 %v849
    %1005 = vmatmul.f32.gmra.mxu0 %v907
    %v1006 = vpop.f32.mrf.mxu0
    %v1007 = vadd.f32 0.0, %v1006
    %1008 = vdwg.mxu0
    %1009 = vmatpush.msra.mxu0 0.0
    %1010 = vmatpush.msra.mxu0 0.0
    %1011 = vmatpush.msra.mxu0 0.0
    %1012 = vmatpush.msra.mxu0 0.0
    %1013 = vmatpush.msra.mxu0 0.0
    %1014 = vmatpush.msra.mxu0 0.0
    %1015 = vmatpush.msra.mxu0 0.0
    %1016 = vmatpush.msra.mxu0 0.0
    %1017 = vmatpush.msra.mxu0 0.0
    %1018 = vmatpush.msra.mxu0 0.0
    %1019 = vmatpush.msra.mxu0 %v900
    %1020 = vmatpush.msra.mxu0 %v890
    %1021 = vmatpush.msra.mxu0 %v880
    %1022 = vmatpush.msra.mxu0 %v870
    %1023 = vmatpush.msra.mxu0 %v860
    %1024 = vmatpush.msra.mxu0 %v850
    %1025 = vmatmul.f32.gmra.mxu0 %v907
    %v1026 = vpop.f32.mrf.mxu0
    %v1027 = vadd.f32 0.0, %v1026
    %1028 = vdwg.mxu0
    %1029 = vmatpush.msra.mxu0 0.0
    %1030 = vmatpush.msra.mxu0 0.0
    %1031 = vmatpush.msra.mxu0 0.0
    %1032 = vmatpush.msra.mxu0 0.0
    %1033 = vmatpush.msra.mxu0 0.0
    %1034 = vmatpush.msra.mxu0 0.0
    %1035 = vmatpush.msra.mxu0 0.0
    %1036 = vmatpush.msra.mxu0 0.0
    %1037 = vmatpush.msra.mxu0 0.0
    %1038 = vmatpush.msra.mxu0 0.0
    %1039 = vmatpush.msra.mxu0 %v901
    %1040 = vmatpush.msra.mxu0 %v891
    %1041 = vmatpush.msra.mxu0 %v881
    %1042 = vmatpush.msra.mxu0 %v871
    %1043 = vmatpush.msra.mxu0 %v861
    %1044 = vmatpush.msra.mxu0 %v851
    %1045 = vmatmul.f32.gmra.mxu0 %v907
    %v1046 = vpop.f32.mrf.mxu0
    %v1047 = vadd.f32 0.0, %v1046
    %1048 = vdwg.mxu0
    %1049 = vmatpush.msra.mxu0 0.0
    %1050 = vmatpush.msra.mxu0 0.0
    %1051 = vmatpush.msra.mxu0 0.0
    %1052 = vmatpush.msra.mxu0 0.0
    %1053 = vmatpush.msra.mxu0 0.0
    %1054 = vmatpush.msra.mxu0 0.0
    %1055 = vmatpush.msra.mxu0 0.0
    %1056 = vmatpush.msra.mxu0 0.0
    %1057 = vmatpush.msra.mxu0 0.0
    %1058 = vmatpush.msra.mxu0 0.0
    %1059 = vmatpush.msra.mxu0 %v902
    %1060 = vmatpush.msra.mxu0 %v892
    %1061 = vmatpush.msra.mxu0 %v882
    %1062 = vmatpush.msra.mxu0 %v872
    %1063 = vmatpush.msra.mxu0 %v862
    %1064 = vmatpush.msra.mxu0 %v852
    %1065 = vmatmul.f32.gmra.mxu0 %v907
    %v1066 = vpop.f32.mrf.mxu0
    %v1067 = vadd.f32 0.0, %v1066
    %1068 = vdwg.mxu0
    %1069 = vmatpush.msra.mxu0 0.0
    %1070 = vmatpush.msra.mxu0 0.0
    %1071 = vmatpush.msra.mxu0 0.0
    %1072 = vmatpush.msra.mxu0 0.0
    %1073 = vmatpush.msra.mxu0 0.0
    %1074 = vmatpush.msra.mxu0 0.0
    %1075 = vmatpush.msra.mxu0 0.0
    %1076 = vmatpush.msra.mxu0 0.0
    %1077 = vmatpush.msra.mxu0 0.0
    %1078 = vmatpush.msra.mxu0 0.0
    %1079 = vmatpush.msra.mxu0 %v903
    %1080 = vmatpush.msra.mxu0 %v893
    %1081 = vmatpush.msra.mxu0 %v883
    %1082 = vmatpush.msra.mxu0 %v873
    %1083 = vmatpush.msra.mxu0 %v863
    %1084 = vmatpush.msra.mxu0 %v853
    %1085 = vmatmul.f32.gmra.mxu0 %v907
    %v1086 = vpop.f32.mrf.mxu0
    %v1087 = vadd.f32 0.0, %v1086
    %1088 = vdwg.mxu0
    %1089 = vmatpush.msra.mxu0 0.0
    %1090 = vmatpush.msra.mxu0 0.0
    %1091 = vmatpush.msra.mxu0 0.0
    %1092 = vmatpush.msra.mxu0 0.0
    %1093 = vmatpush.msra.mxu0 0.0
    %1094 = vmatpush.msra.mxu0 0.0
    %1095 = vmatpush.msra.mxu0 0.0
    %1096 = vmatpush.msra.mxu0 0.0
    %1097 = vmatpush.msra.mxu0 0.0
    %1098 = vmatpush.msra.mxu0 0.0
    %1099 = vmatpush.msra.mxu0 %v904
    %1100 = vmatpush.msra.mxu0 %v894
    %1101 = vmatpush.msra.mxu0 %v884
    %1102 = vmatpush.msra.mxu0 %v874
    %1103 = vmatpush.msra.mxu0 %v864
    %1104 = vmatpush.msra.mxu0 %v854
    %1105 = vmatmul.f32.gmra.mxu0 %v907
    %v1106 = vpop.f32.mrf.mxu0
    %v1107 = vadd.f32 0.0, %v1106
    %1108 = vdwg.mxu0
    %v1109 = vmul.f32 %v927, %v281
    %v1110 = vmul.f32 %v947, %v282
    %v1111 = vmul.f32 %v967, %v283
    %v1112 = vmul.f32 %v987, %v284
    %v1113 = vmul.f32 %v1007, %v285
    %v1114 = vmul.f32 %v1027, %v286
    %v1115 = vmul.f32 %v1047, %v287
    %v1116 = vmul.f32 %v1067, %v288
    %v1117 = vmul.f32 %v1087, %v289
    %v1118 = vmul.f32 %v1107, %v290
    %vm1119 = vcmask 1045504
    %v1120 = vsel %vm1119, %v1109, 0.0
    %v1121 = vsel %vm1119, %v1110, 0.0
    %v1122 = vadd.f32 %v1120, %v1121
    %v1123 = vsel %vm1119, %v1111, 0.0
    %v1124 = vadd.f32 %v1122, %v1123
    %v1125 = vsel %vm1119, %v1112, 0.0
    %v1126 = vadd.f32 %v1124, %v1125
    %v1127 = vsel %vm1119, %v1113, 0.0
    %v1128 = vadd.f32 %v1126, %v1127
    %v1129 = vsel %vm1119, %v1114, 0.0
    %v1130 = vadd.f32 %v1128, %v1129
    %v1131 = vsel %vm1119, %v1115, 0.0
    %v1132 = vadd.f32 %v1130, %v1131
    %v1133 = vsel %vm1119, %v1116, 0.0
    %v1134 = vadd.f32 %v1132, %v1133
    %v1135 = vsel %vm1119, %v1117, 0.0
    %v1136 = vadd.f32 %v1134, %v1135
    %v1137 = vsel %vm1119, %v1118, 0.0
    %v1138 = vadd.f32 %v1136, %v1137
    %1139 = vadd.xlane.f32.xlu0 %v1138
    %v1140 = vpop.xlane.xlu0 %1139
    %v1141 = vmul.f32 %v1140, 0.0008
    %v1142 = vmul.f32 %v1109, %v927
    %v1143 = vmul.f32 %v1110, %v947
    %v1144 = vmul.f32 %v1111, %v967
    %v1145 = vmul.f32 %v1112, %v987
    %v1146 = vmul.f32 %v1113, %v1007
    %v1147 = vmul.f32 %v1114, %v1027
    %v1148 = vmul.f32 %v1115, %v1047
    %v1149 = vmul.f32 %v1116, %v1067
    %v1150 = vmul.f32 %v1117, %v1087
    %v1151 = vmul.f32 %v1118, %v1107
    %v1152 = vsel %vm1119, %v1142, 0.0
    %v1153 = vsel %vm1119, %v1143, 0.0
    %v1154 = vadd.f32 %v1152, %v1153
    %v1155 = vsel %vm1119, %v1144, 0.0
    %v1156 = vadd.f32 %v1154, %v1155
    %v1157 = vsel %vm1119, %v1145, 0.0
    %v1158 = vadd.f32 %v1156, %v1157
    %v1159 = vsel %vm1119, %v1146, 0.0
    %v1160 = vadd.f32 %v1158, %v1159
    %v1161 = vsel %vm1119, %v1147, 0.0
    %v1162 = vadd.f32 %v1160, %v1161
    %v1163 = vsel %vm1119, %v1148, 0.0
    %v1164 = vadd.f32 %v1162, %v1163
    %v1165 = vsel %vm1119, %v1149, 0.0
    %v1166 = vadd.f32 %v1164, %v1165
    %v1167 = vsel %vm1119, %v1150, 0.0
    %v1168 = vadd.f32 %v1166, %v1167
    %v1169 = vsel %vm1119, %v1151, 0.0
    %v1170 = vadd.f32 %v1168, %v1169
    %1171 = vadd.xlane.f32.xlu0 %v1170
    %v1172 = vpop.xlane.xlu0 %1171
    %v1173 = vmul.f32 %v1172, 0.0008
    %v1174 = vsub.f32 %v927, %v1141
    %v1175 = vsub.f32 %v947, %v1141
    %v1176 = vsub.f32 %v967, %v1141
    %v1177 = vsub.f32 %v987, %v1141
    %v1178 = vsub.f32 %v1007, %v1141
    %v1179 = vsub.f32 %v1027, %v1141
    %v1180 = vsub.f32 %v1047, %v1141
    %v1181 = vsub.f32 %v1067, %v1141
    %v1182 = vsub.f32 %v1087, %v1141
    %v1183 = vsub.f32 %v1107, %v1141
    %v1184 = vmul.f32 %v1141, %v1141
    %v1185 = vsub.f32 %v1173, %v1184
    %v1186 = vadd.f32 %v1185, 1e-05
    %v1187 = vrsqrt.pop %v1186
    %v1188 = vmul.f32 %v1187, %v1186
    %v1189 = vmul.f32 %v1188, %v1187
    %v1190 = vmul.f32 0.5, %v1189
    %v1191 = vsub.f32 1.5, %v1190
    %v1192 = vmul.f32 %v1187, %v1191
    %vm1193 = vweird.f32 %v1186
    %vm1194 = vweird.f32 %v1187
    %vm1195 = vmor %vm1193, %vm1194
    %v1196 = vsel %vm1195, %v1187, %v1192
    %v1197 = vmul.f32 %v1174, %v1196
    %v1198 = vmul.f32 %v1175, %v1196
    %v1199 = vmul.f32 %v1176, %v1196
    %v1200 = vmul.f32 %v1177, %v1196
    %v1201 = vmul.f32 %v1178, %v1196
    %v1202 = vmul.f32 %v1179, %v1196
    %v1203 = vmul.f32 %v1180, %v1196
    %v1204 = vmul.f32 %v1181, %v1196
    %v1205 = vmul.f32 %v1182, %v1196
    %v1206 = vmul.f32 %v1183, %v1196
    %vm1207 = vcmp.ge.f32.partialorder %v1197, 0.0
    %vm1208 = vcmp.ge.f32.partialorder %v1198, 0.0
    %vm1209 = vcmp.ge.f32.partialorder %v1199, 0.0
    %vm1210 = vcmp.ge.f32.partialorder %v1200, 0.0
    %vm1211 = vcmp.ge.f32.partialorder %v1201, 0.0
    %vm1212 = vcmp.ge.f32.partialorder %v1202, 0.0
    %vm1213 = vcmp.ge.f32.partialorder %v1203, 0.0
    %vm1214 = vcmp.ge.f32.partialorder %v1204, 0.0
    %vm1215 = vcmp.ge.f32.partialorder %v1205, 0.0
    %vm1216 = vcmp.ge.f32.partialorder %v1206, 0.0
    %v1217 = vmul.f32 %v1197, 0.01
    %v1218 = vmul.f32 %v1198, 0.01
    %v1219 = vmul.f32 %v1199, 0.01
    %v1220 = vmul.f32 %v1200, 0.01
    %v1221 = vmul.f32 %v1201, 0.01
    %v1222 = vmul.f32 %v1202, 0.01
    %v1223 = vmul.f32 %v1203, 0.01
    %v1224 = vmul.f32 %v1204, 0.01
    %v1225 = vmul.f32 %v1205, 0.01
    %v1226 = vmul.f32 %v1206, 0.01
    %v1227 = vsel %vm1207, %v1197, %v1217
    %v1228 = vsel %vm1208, %v1198, %v1218
    %v1229 = vsel %vm1209, %v1199, %v1219
    %v1230 = vsel %vm1210, %v1200, %v1220
    %v1231 = vsel %vm1211, %v1201, %v1221
    %v1232 = vsel %vm1212, %v1202, %v1222
    %v1233 = vsel %vm1213, %v1203, %v1223
    %v1234 = vsel %vm1214, %v1204, %v1224
    %v1235 = vsel %vm1215, %v1205, %v1225
    %v1236 = vsel %vm1216, %v1206, %v1226
    %v1237 = vmul.f32 %v1227, %v281
    %v1238 = vmul.f32 %v1228, %v282
    %v1239 = vmul.f32 %v1229, %v283
    %v1240 = vmul.f32 %v1230, %v284
    %v1241 = vmul.f32 %v1231, %v285
    %v1242 = vmul.f32 %v1232, %v286
    %v1243 = vmul.f32 %v1233, %v287
    %v1244 = vmul.f32 %v1234, %v288
    %v1245 = vmul.f32 %v1235, %v289
    %v1246 = vmul.f32 %v1236, %v290
    %v1247 = vld [vmem:[%s2] sm:$0xff]
    %v1248 = vld [vmem:[%s2 + $0x8] sm:$0xff]
    %v1249 = vld [vmem:[%s2 + $0x10] sm:$0xff]
    %v1250 = vld [vmem:[%s2 + $0x18] sm:$0xff]
    %v1251 = vld [vmem:[%s2 + $0x20] sm:$0xff]
    %v1252 = vld [vmem:[%s2 + $0x28] sm:$0xff]
    %vm1253 = vcmask 48128
    %v1255 = vsel %vm1253, %v1247, 0
    %v1258 = vsel %vm1253, %v1248, 0
    %v1261 = vsel %vm1253, %v1249, 0
    %v1264 = vsel %vm1253, %v1250, 0
    %v1267 = vsel %vm1253, %v1251, 0
    %v1270 = vsel %vm1253, %v1252, 0
    %v1273 = vsel %vm1119, %v1237, 0
    %v1276 = vsel %vm1119, %v1238, 0
    %v1279 = vsel %vm1119, %v1239, 0
    %v1282 = vsel %vm1119, %v1240, 0
    %v1285 = vsel %vm1119, %v1241, 0
    %v1288 = vsel %vm1119, %v1242, 0
    %v1291 = vsel %vm1119, %v1243, 0
    %v1294 = vsel %vm1119, %v1244, 0
    %v1297 = vsel %vm1119, %v1245, 0
    %v1300 = vsel %vm1119, %v1246, 0
    %1302 = vmatpush.msra.mxu0 0.0
    %1303 = vmatpush.msra.mxu0 0.0
    %1304 = vmatpush.msra.mxu0 0.0
    %1305 = vmatpush.msra.mxu0 0.0
    %1306 = vmatpush.msra.mxu0 0.0
    %1307 = vmatpush.msra.mxu0 0.0
    %1308 = vmatpush.msra.mxu0 0.0
    %1309 = vmatpush.msra.mxu0 0.0
    %1310 = vmatpush.msra.mxu0 0.0
    %1311 = vmatpush.msra.mxu0 0.0
    %1312 = vmatpush.msra.mxu0 0.0
    %1313 = vmatpush.msra.mxu0 0.0
    %1314 = vmatpush.msra.mxu0 0.0
    %1315 = vmatpush.msra.mxu0 0.0
    %1316 = vmatpush.msra.mxu0 0.0
    %1317 = vmatpush.msra.mxu0 %v1273
    %1318 = vmatmul.f32.gmra.mxu0 %v1255
    %v1319 = vpop.f32.mrf.mxu0
    %v1320 = vadd.f32 0.0, %v1319
    %1321 = vmatmul.f32.gmra.mxu0 %v1258
    %v1322 = vpop.f32.mrf.mxu0
    %v1323 = vadd.f32 0.0, %v1322
    %1324 = vmatmul.f32.gmra.mxu0 %v1261
    %v1325 = vpop.f32.mrf.mxu0
    %v1326 = vadd.f32 0.0, %v1325
    %1327 = vmatmul.f32.gmra.mxu0 %v1264
    %v1328 = vpop.f32.mrf.mxu0
    %v1329 = vadd.f32 0.0, %v1328
    %1330 = vmatmul.f32.gmra.mxu0 %v1267
    %v1331 = vpop.f32.mrf.mxu0
    %v1332 = vadd.f32 0.0, %v1331
    %1333 = vmatmul.f32.gmra.mxu0 %v1270
    %v1334 = vpop.f32.mrf.mxu0
    %v1335 = vadd.f32 0.0, %v1334
    %1336 = vdwg.mxu0
    %1337 = vmatpush.msra.mxu0 0.0
    %1338 = vmatpush.msra.mxu0 0.0
    %1339 = vmatpush.msra.mxu0 0.0
    %1340 = vmatpush.msra.mxu0 0.0
    %1341 = vmatpush.msra.mxu0 0.0
    %1342 = vmatpush.msra.mxu0 0.0
    %1343 = vmatpush.msra.mxu0 0.0
    %1344 = vmatpush.msra.mxu0 0.0
    %1345 = vmatpush.msra.mxu0 0.0
    %1346 = vmatpush.msra.mxu0 0.0
    %1347 = vmatpush.msra.mxu0 0.0
    %1348 = vmatpush.msra.mxu0 0.0
    %1349 = vmatpush.msra.mxu0 0.0
    %1350 = vmatpush.msra.mxu0 0.0
    %1351 = vmatpush.msra.mxu0 0.0
    %1352 = vmatpush.msra.mxu0 %v1276
    %1353 = vmatmul.f32.gmra.mxu0 %v1255
    %v1354 = vpop.f32.mrf.mxu0
    %v1355 = vadd.f32 0.0, %v1354
    %1356 = vmatmul.f32.gmra.mxu0 %v1258
    %v1357 = vpop.f32.mrf.mxu0
    %v1358 = vadd.f32 0.0, %v1357
    %1359 = vmatmul.f32.gmra.mxu0 %v1261
    %v1360 = vpop.f32.mrf.mxu0
    %v1361 = vadd.f32 0.0, %v1360
    %1362 = vmatmul.f32.gmra.mxu0 %v1264
    %v1363 = vpop.f32.mrf.mxu0
    %v1364 = vadd.f32 0.0, %v1363
    %1365 = vmatmul.f32.gmra.mxu0 %v1267
    %v1366 = vpop.f32.mrf.mxu0
    %v1367 = vadd.f32 0.0, %v1366
    %1368 = vmatmul.f32.gmra.mxu0 %v1270
    %v1369 = vpop.f32.mrf.mxu0
    %v1370 = vadd.f32 0.0, %v1369
    %1371 = vdwg.mxu0
    %1372 = vmatpush.msra.mxu0 0.0
    %1373 = vmatpush.msra.mxu0 0.0
    %1374 = vmatpush.msra.mxu0 0.0
    %1375 = vmatpush.msra.mxu0 0.0
    %1376 = vmatpush.msra.mxu0 0.0
    %1377 = vmatpush.msra.mxu0 0.0
    %1378 = vmatpush.msra.mxu0 0.0
    %1379 = vmatpush.msra.mxu0 0.0
    %1380 = vmatpush.msra.mxu0 0.0
    %1381 = vmatpush.msra.mxu0 0.0
    %1382 = vmatpush.msra.mxu0 0.0
    %1383 = vmatpush.msra.mxu0 0.0
    %1384 = vmatpush.msra.mxu0 0.0
    %1385 = vmatpush.msra.mxu0 0.0
    %1386 = vmatpush.msra.mxu0 0.0
    %1387 = vmatpush.msra.mxu0 %v1279
    %1388 = vmatmul.f32.gmra.mxu0 %v1255
    %v1389 = vpop.f32.mrf.mxu0
    %v1390 = vadd.f32 0.0, %v1389
    %1391 = vmatmul.f32.gmra.mxu0 %v1258
    %v1392 = vpop.f32.mrf.mxu0
    %v1393 = vadd.f32 0.0, %v1392
    %1394 = vmatmul.f32.gmra.mxu0 %v1261
    %v1395 = vpop.f32.mrf.mxu0
    %v1396 = vadd.f32 0.0, %v1395
    %1397 = vmatmul.f32.gmra.mxu0 %v1264
    %v1398 = vpop.f32.mrf.mxu0
    %v1399 = vadd.f32 0.0, %v1398
    %1400 = vmatmul.f32.gmra.mxu0 %v1267
    %v1401 = vpop.f32.mrf.mxu0
    %v1402 = vadd.f32 0.0, %v1401
    %1403 = vmatmul.f32.gmra.mxu0 %v1270
    %v1404 = vpop.f32.mrf.mxu0
    %v1405 = vadd.f32 0.0, %v1404
    %1406 = vdwg.mxu0
    %1407 = vmatpush.msra.mxu0 0.0
    %1408 = vmatpush.msra.mxu0 0.0
    %1409 = vmatpush.msra.mxu0 0.0
    %1410 = vmatpush.msra.mxu0 0.0
    %1411 = vmatpush.msra.mxu0 0.0
    %1412 = vmatpush.msra.mxu0 0.0
    %1413 = vmatpush.msra.mxu0 0.0
    %1414 = vmatpush.msra.mxu0 0.0
    %1415 = vmatpush.msra.mxu0 0.0
    %1416 = vmatpush.msra.mxu0 0.0
    %1417 = vmatpush.msra.mxu0 0.0
    %1418 = vmatpush.msra.mxu0 0.0
    %1419 = vmatpush.msra.mxu0 0.0
    %1420 = vmatpush.msra.mxu0 0.0
    %1421 = vmatpush.msra.mxu0 0.0
    %1422 = vmatpush.msra.mxu0 %v1282
    %1423 = vmatmul.f32.gmra.mxu0 %v1255
    %v1424 = vpop.f32.mrf.mxu0
    %v1425 = vadd.f32 0.0, %v1424
    %1426 = vmatmul.f32.gmra.mxu0 %v1258
    %v1427 = vpop.f32.mrf.mxu0
    %v1428 = vadd.f32 0.0, %v1427
    %1429 = vmatmul.f32.gmra.mxu0 %v1261
    %v1430 = vpop.f32.mrf.mxu0
    %v1431 = vadd.f32 0.0, %v1430
    %1432 = vmatmul.f32.gmra.mxu0 %v1264
    %v1433 = vpop.f32.mrf.mxu0
    %v1434 = vadd.f32 0.0, %v1433
    %1435 = vmatmul.f32.gmra.mxu0 %v1267
    %v1436 = vpop.f32.mrf.mxu0
    %v1437 = vadd.f32 0.0, %v1436
    %1438 = vmatmul.f32.gmra.mxu0 %v1270
    %v1439 = vpop.f32.mrf.mxu0
    %v1440 = vadd.f32 0.0, %v1439
    %1441 = vdwg.mxu0
    %1442 = vmatpush.msra.mxu0 0.0
    %1443 = vmatpush.msra.mxu0 0.0
    %1444 = vmatpush.msra.mxu0 0.0
    %1445 = vmatpush.msra.mxu0 0.0
    %1446 = vmatpush.msra.mxu0 0.0
    %1447 = vmatpush.msra.mxu0 0.0
    %1448 = vmatpush.msra.mxu0 0.0
    %1449 = vmatpush.msra.mxu0 0.0
    %1450 = vmatpush.msra.mxu0 0.0
    %1451 = vmatpush.msra.mxu0 0.0
    %1452 = vmatpush.msra.mxu0 0.0
    %1453 = vmatpush.msra.mxu0 0.0
    %1454 = vmatpush.msra.mxu0 0.0
    %1455 = vmatpush.msra.mxu0 0.0
    %1456 = vmatpush.msra.mxu0 0.0
    %1457 = vmatpush.msra.mxu0 %v1285
    %1458 = vmatmul.f32.gmra.mxu0 %v1255
    %v1459 = vpop.f32.mrf.mxu0
    %v1460 = vadd.f32 0.0, %v1459
    %1461 = vmatmul.f32.gmra.mxu0 %v1258
    %v1462 = vpop.f32.mrf.mxu0
    %v1463 = vadd.f32 0.0, %v1462
    %1464 = vmatmul.f32.gmra.mxu0 %v1261
    %v1465 = vpop.f32.mrf.mxu0
    %v1466 = vadd.f32 0.0, %v1465
    %1467 = vmatmul.f32.gmra.mxu0 %v1264
    %v1468 = vpop.f32.mrf.mxu0
    %v1469 = vadd.f32 0.0, %v1468
    %1470 = vmatmul.f32.gmra.mxu0 %v1267
    %v1471 = vpop.f32.mrf.mxu0
    %v1472 = vadd.f32 0.0, %v1471
    %1473 = vmatmul.f32.gmra.mxu0 %v1270
    %v1474 = vpop.f32.mrf.mxu0
    %v1475 = vadd.f32 0.0, %v1474
    %1476 = vdwg.mxu0
    %1477 = vmatpush.msra.mxu0 0.0
    %1478 = vmatpush.msra.mxu0 0.0
    %1479 = vmatpush.msra.mxu0 0.0
    %1480 = vmatpush.msra.mxu0 0.0
    %1481 = vmatpush.msra.mxu0 0.0
    %1482 = vmatpush.msra.mxu0 0.0
    %1483 = vmatpush.msra.mxu0 0.0
    %1484 = vmatpush.msra.mxu0 0.0
    %1485 = vmatpush.msra.mxu0 0.0
    %1486 = vmatpush.msra.mxu0 0.0
    %1487 = vmatpush.msra.mxu0 0.0
    %1488 = vmatpush.msra.mxu0 0.0
    %1489 = vmatpush.msra.mxu0 0.0
    %1490 = vmatpush.msra.mxu0 0.0
    %1491 = vmatpush.msra.mxu0 0.0
    %1492 = vmatpush.msra.mxu0 %v1288
    %1493 = vmatmul.f32.gmra.mxu0 %v1255
    %v1494 = vpop.f32.mrf.mxu0
    %v1495 = vadd.f32 0.0, %v1494
    %1496 = vmatmul.f32.gmra.mxu0 %v1258
    %v1497 = vpop.f32.mrf.mxu0
    %v1498 = vadd.f32 0.0, %v1497
    %1499 = vmatmul.f32.gmra.mxu0 %v1261
    %v1500 = vpop.f32.mrf.mxu0
    %v1501 = vadd.f32 0.0, %v1500
    %1502 = vmatmul.f32.gmra.mxu0 %v1264
    %v1503 = vpop.f32.mrf.mxu0
    %v1504 = vadd.f32 0.0, %v1503
    %1505 = vmatmul.f32.gmra.mxu0 %v1267
    %v1506 = vpop.f32.mrf.mxu0
    %v1507 = vadd.f32 0.0, %v1506
    %1508 = vmatmul.f32.gmra.mxu0 %v1270
    %v1509 = vpop.f32.mrf.mxu0
    %v1510 = vadd.f32 0.0, %v1509
    %1511 = vdwg.mxu0
    %1512 = vmatpush.msra.mxu0 0.0
    %1513 = vmatpush.msra.mxu0 0.0
    %1514 = vmatpush.msra.mxu0 0.0
    %1515 = vmatpush.msra.mxu0 0.0
    %1516 = vmatpush.msra.mxu0 0.0
    %1517 = vmatpush.msra.mxu0 0.0
    %1518 = vmatpush.msra.mxu0 0.0
    %1519 = vmatpush.msra.mxu0 0.0
    %1520 = vmatpush.msra.mxu0 0.0
    %1521 = vmatpush.msra.mxu0 0.0
    %1522 = vmatpush.msra.mxu0 0.0
    %1523 = vmatpush.msra.mxu0 0.0
    %1524 = vmatpush.msra.mxu0 0.0
    %1525 = vmatpush.msra.mxu0 0.0
    %1526 = vmatpush.msra.mxu0 0.0
    %1527 = vmatpush.msra.mxu0 %v1291
    %1528 = vmatmul.f32.gmra.mxu0 %v1255
    %v1529 = vpop.f32.mrf.mxu0
    %v1530 = vadd.f32 0.0, %v1529
    %1531 = vmatmul.f32.gmra.mxu0 %v1258
    %v1532 = vpop.f32.mrf.mxu0
    %v1533 = vadd.f32 0.0, %v1532
    %1534 = vmatmul.f32.gmra.mxu0 %v1261
    %v1535 = vpop.f32.mrf.mxu0
    %v1536 = vadd.f32 0.0, %v1535
    %1537 = vmatmul.f32.gmra.mxu0 %v1264
    %v1538 = vpop.f32.mrf.mxu0
    %v1539 = vadd.f32 0.0, %v1538
    %1540 = vmatmul.f32.gmra.mxu0 %v1267
    %v1541 = vpop.f32.mrf.mxu0
    %v1542 = vadd.f32 0.0, %v1541
    %1543 = vmatmul.f32.gmra.mxu0 %v1270
    %v1544 = vpop.f32.mrf.mxu0
    %v1545 = vadd.f32 0.0, %v1544
    %1546 = vdwg.mxu0
    %1547 = vmatpush.msra.mxu0 0.0
    %1548 = vmatpush.msra.mxu0 0.0
    %1549 = vmatpush.msra.mxu0 0.0
    %1550 = vmatpush.msra.mxu0 0.0
    %1551 = vmatpush.msra.mxu0 0.0
    %1552 = vmatpush.msra.mxu0 0.0
    %1553 = vmatpush.msra.mxu0 0.0
    %1554 = vmatpush.msra.mxu0 0.0
    %1555 = vmatpush.msra.mxu0 0.0
    %1556 = vmatpush.msra.mxu0 0.0
    %1557 = vmatpush.msra.mxu0 0.0
    %1558 = vmatpush.msra.mxu0 0.0
    %1559 = vmatpush.msra.mxu0 0.0
    %1560 = vmatpush.msra.mxu0 0.0
    %1561 = vmatpush.msra.mxu0 0.0
    %1562 = vmatpush.msra.mxu0 %v1294
    %1563 = vmatmul.f32.gmra.mxu0 %v1255
    %v1564 = vpop.f32.mrf.mxu0
    %v1565 = vadd.f32 0.0, %v1564
    %1566 = vmatmul.f32.gmra.mxu0 %v1258
    %v1567 = vpop.f32.mrf.mxu0
    %v1568 = vadd.f32 0.0, %v1567
    %1569 = vmatmul.f32.gmra.mxu0 %v1261
    %v1570 = vpop.f32.mrf.mxu0
    %v1571 = vadd.f32 0.0, %v1570
    %1572 = vmatmul.f32.gmra.mxu0 %v1264
    %v1573 = vpop.f32.mrf.mxu0
    %v1574 = vadd.f32 0.0, %v1573
    %1575 = vmatmul.f32.gmra.mxu0 %v1267
    %v1576 = vpop.f32.mrf.mxu0
    %v1577 = vadd.f32 0.0, %v1576
    %1578 = vmatmul.f32.gmra.mxu0 %v1270
    %v1579 = vpop.f32.mrf.mxu0
    %v1580 = vadd.f32 0.0, %v1579
    %1581 = vdwg.mxu0
    %1582 = vmatpush.msra.mxu0 0.0
    %1583 = vmatpush.msra.mxu0 0.0
    %1584 = vmatpush.msra.mxu0 0.0
    %1585 = vmatpush.msra.mxu0 0.0
    %1586 = vmatpush.msra.mxu0 0.0
    %1587 = vmatpush.msra.mxu0 0.0
    %1588 = vmatpush.msra.mxu0 0.0
    %1589 = vmatpush.msra.mxu0 0.0
    %1590 = vmatpush.msra.mxu0 0.0
    %1591 = vmatpush.msra.mxu0 0.0
    %1592 = vmatpush.msra.mxu0 0.0
    %1593 = vmatpush.msra.mxu0 0.0
    %1594 = vmatpush.msra.mxu0 0.0
    %1595 = vmatpush.msra.mxu0 0.0
    %1596 = vmatpush.msra.mxu0 0.0
    %1597 = vmatpush.msra.mxu0 %v1297
    %1598 = vmatmul.f32.gmra.mxu0 %v1255
    %v1599 = vpop.f32.mrf.mxu0
    %v1600 = vadd.f32 0.0, %v1599
    %1601 = vmatmul.f32.gmra.mxu0 %v1258
    %v1602 = vpop.f32.mrf.mxu0
    %v1603 = vadd.f32 0.0, %v1602
    %1604 = vmatmul.f32.gmra.mxu0 %v1261
    %v1605 = vpop.f32.mrf.mxu0
    %v1606 = vadd.f32 0.0, %v1605
    %1607 = vmatmul.f32.gmra.mxu0 %v1264
    %v1608 = vpop.f32.mrf.mxu0
    %v1609 = vadd.f32 0.0, %v1608
    %1610 = vmatmul.f32.gmra.mxu0 %v1267
    %v1611 = vpop.f32.mrf.mxu0
    %v1612 = vadd.f32 0.0, %v1611
    %1613 = vmatmul.f32.gmra.mxu0 %v1270
    %v1614 = vpop.f32.mrf.mxu0
    %v1615 = vadd.f32 0.0, %v1614
    %1616 = vdwg.mxu0
    %1617 = vmatpush.msra.mxu0 0.0
    %1618 = vmatpush.msra.mxu0 0.0
    %1619 = vmatpush.msra.mxu0 0.0
    %1620 = vmatpush.msra.mxu0 0.0
    %1621 = vmatpush.msra.mxu0 0.0
    %1622 = vmatpush.msra.mxu0 0.0
    %1623 = vmatpush.msra.mxu0 0.0
    %1624 = vmatpush.msra.mxu0 0.0
    %1625 = vmatpush.msra.mxu0 0.0
    %1626 = vmatpush.msra.mxu0 0.0
    %1627 = vmatpush.msra.mxu0 0.0
    %1628 = vmatpush.msra.mxu0 0.0
    %1629 = vmatpush.msra.mxu0 0.0
    %1630 = vmatpush.msra.mxu0 0.0
    %1631 = vmatpush.msra.mxu0 0.0
    %1632 = vmatpush.msra.mxu0 %v1300
    %1633 = vmatmul.f32.gmra.mxu0 %v1255
    %v1634 = vpop.f32.mrf.mxu0
    %v1635 = vadd.f32 0.0, %v1634
    %1636 = vmatmul.f32.gmra.mxu0 %v1258
    %v1637 = vpop.f32.mrf.mxu0
    %v1638 = vadd.f32 0.0, %v1637
    %1639 = vmatmul.f32.gmra.mxu0 %v1261
    %v1640 = vpop.f32.mrf.mxu0
    %v1641 = vadd.f32 0.0, %v1640
    %1642 = vmatmul.f32.gmra.mxu0 %v1264
    %v1643 = vpop.f32.mrf.mxu0
    %v1644 = vadd.f32 0.0, %v1643
    %1645 = vmatmul.f32.gmra.mxu0 %v1267
    %v1646 = vpop.f32.mrf.mxu0
    %v1647 = vadd.f32 0.0, %v1646
    %1648 = vmatmul.f32.gmra.mxu0 %v1270
    %v1649 = vpop.f32.mrf.mxu0
    %v1650 = vadd.f32 0.0, %v1649
    %1651 = vdwg.mxu0
    %1652 = vst [vmem:[#allocation3] sm:$0xff] %v1320
    %1653 = vst [vmem:[#allocation3 + $0x8] sm:$0xff] %v1355
    %1654 = vst [vmem:[#allocation3 + $0x10] sm:$0xff] %v1390
    %1655 = vst [vmem:[#allocation3 + $0x18] sm:$0xff] %v1425
    %1656 = vst [vmem:[#allocation3 + $0x20] sm:$0xff] %v1460
    %1657 = vst [vmem:[#allocation3 + $0x28] sm:$0xff] %v1495
    %1658 = vst [vmem:[#allocation3 + $0x30] sm:$0xff] %v1530
    %1659 = vst [vmem:[#allocation3 + $0x38] sm:$0xff] %v1565
    %1660 = vst [vmem:[#allocation3 + $0x40] sm:$0xff] %v1600
    %1661 = vst [vmem:[#allocation3 + $0x48] sm:$0xff] %v1635
    %1662 = vst [vmem:[#allocation3 + $0x50] sm:$0xff] %v1323
    %1663 = vst [vmem:[#allocation3 + $0x58] sm:$0xff] %v1358
    %1664 = vst [vmem:[#allocation3 + $0x60] sm:$0xff] %v1393
    %1665 = vst [vmem:[#allocation3 + $0x68] sm:$0xff] %v1428
    %1666 = vst [vmem:[#allocation3 + $0x70] sm:$0xff] %v1463
    %1667 = vst [vmem:[#allocation3 + $0x78] sm:$0xff] %v1498
    %1668 = vst [vmem:[#allocation3 + $0x80] sm:$0xff] %v1533
    %1669 = vst [vmem:[#allocation3 + $0x88] sm:$0xff] %v1568
    %1670 = vst [vmem:[#allocation3 + $0x90] sm:$0xff] %v1603
    %1671 = vst [vmem:[#allocation3 + $0x98] sm:$0xff] %v1638
    %1672 = vst [vmem:[#allocation3 + $0xa0] sm:$0xff] %v1326
    %1673 = vst [vmem:[#allocation3 + $0xa8] sm:$0xff] %v1361
    %1674 = vst [vmem:[#allocation3 + $0xb0] sm:$0xff] %v1396
    %1675 = vst [vmem:[#allocation3 + $0xb8] sm:$0xff] %v1431
    %1676 = vst [vmem:[#allocation3 + $0xc0] sm:$0xff] %v1466
    %1677 = vst [vmem:[#allocation3 + $0xc8] sm:$0xff] %v1501
    %1678 = vst [vmem:[#allocation3 + $0xd0] sm:$0xff] %v1536
    %1679 = vst [vmem:[#allocation3 + $0xd8] sm:$0xff] %v1571
    %1680 = vst [vmem:[#allocation3 + $0xe0] sm:$0xff] %v1606
    %1681 = vst [vmem:[#allocation3 + $0xe8] sm:$0xff] %v1641
    %1682 = vst [vmem:[#allocation3 + $0xf0] sm:$0xff] %v1329
    %1683 = vst [vmem:[#allocation3 + $0xf8] sm:$0xff] %v1364
    %1684 = vst [vmem:[#allocation3 + $0x100] sm:$0xff] %v1399
    %1685 = vst [vmem:[#allocation3 + $0x108] sm:$0xff] %v1434
    %1686 = vst [vmem:[#allocation3 + $0x110] sm:$0xff] %v1469
    %1687 = vst [vmem:[#allocation3 + $0x118] sm:$0xff] %v1504
    %1688 = vst [vmem:[#allocation3 + $0x120] sm:$0xff] %v1539
    %1689 = vst [vmem:[#allocation3 + $0x128] sm:$0xff] %v1574
    %1690 = vst [vmem:[#allocation3 + $0x130] sm:$0xff] %v1609
    %1691 = vst [vmem:[#allocation3 + $0x138] sm:$0xff] %v1644
    %1692 = vst [vmem:[#allocation3 + $0x140] sm:$0xff] %v1332
    %1693 = vst [vmem:[#allocation3 + $0x148] sm:$0xff] %v1367
    %1694 = vst [vmem:[#allocation3 + $0x150] sm:$0xff] %v1402
    %1695 = vst [vmem:[#allocation3 + $0x158] sm:$0xff] %v1437
    %1696 = vst [vmem:[#allocation3 + $0x160] sm:$0xff] %v1472
    %1697 = vst [vmem:[#allocation3 + $0x168] sm:$0xff] %v1507
    %1698 = vst [vmem:[#allocation3 + $0x170] sm:$0xff] %v1542
    %1699 = vst [vmem:[#allocation3 + $0x178] sm:$0xff] %v1577
    %1700 = vst [vmem:[#allocation3 + $0x180] sm:$0xff] %v1612
    %1701 = vst [vmem:[#allocation3 + $0x188] sm:$0xff] %v1647
    %1702 = vst [vmem:[#allocation3 + $0x190] sm:$0xff] %v1335
    %1703 = vst [vmem:[#allocation3 + $0x198] sm:$0xff] %v1370
    %1704 = vst [vmem:[#allocation3 + $0x1a0] sm:$0xff] %v1405
    %1705 = vst [vmem:[#allocation3 + $0x1a8] sm:$0xff] %v1440
    %1706 = vst [vmem:[#allocation3 + $0x1b0] sm:$0xff] %v1475
    %1707 = vst [vmem:[#allocation3 + $0x1b8] sm:$0xff] %v1510
    %1708 = vst [vmem:[#allocation3 + $0x1c0] sm:$0xff] %v1545
    %1709 = vst [vmem:[#allocation3 + $0x1c8] sm:$0xff] %v1580
    %1710 = vst [vmem:[#allocation3 + $0x1d0] sm:$0xff] %v1615
    %1711 = vst [vmem:[#allocation3 + $0x1d8] sm:$0xff] %v1650
    %v1712 = vld [vmem:[#allocation3] sm:$0xff]
    %v1713 = vld [vmem:[#allocation3 + $0x8] sm:$0xff]
    %v1714 = vld [vmem:[#allocation3 + $0x10] sm:$0xff]
    %v1715 = vld [vmem:[#allocation3 + $0x18] sm:$0xff]
    %v1716 = vld [vmem:[#allocation3 + $0x20] sm:$0xff]
    %v1717 = vld [vmem:[#allocation3 + $0x28] sm:$0xff]
    %v1718 = vld [vmem:[#allocation3 + $0x30] sm:$0xff]
    %v1719 = vld [vmem:[#allocation3 + $0x38] sm:$0xff]
    %v1720 = vld [vmem:[#allocation3 + $0x40] sm:$0xff]
    %v1721 = vld [vmem:[#allocation3 + $0x48] sm:$0xff]
    %v1722 = vld [vmem:[#allocation3 + $0x50] sm:$0xff]
    %v1723 = vld [vmem:[#allocation3 + $0x58] sm:$0xff]
    %v1724 = vld [vmem:[#allocation3 + $0x60] sm:$0xff]
    %v1725 = vld [vmem:[#allocation3 + $0x68] sm:$0xff]
    %v1726 = vld [vmem:[#allocation3 + $0x70] sm:$0xff]
    %v1727 = vld [vmem:[#allocation3 + $0x78] sm:$0xff]
    %v1728 = vld [vmem:[#allocation3 + $0x80] sm:$0xff]
    %v1729 = vld [vmem:[#allocation3 + $0x88] sm:$0xff]
    %v1730 = vld [vmem:[#allocation3 + $0x90] sm:$0xff]
    %v1731 = vld [vmem:[#allocation3 + $0x98] sm:$0xff]
    %v1732 = vadd.f32 %v1712, %v1713
    %v1733 = vadd.f32 %v1732, %v1714
    %v1734 = vadd.f32 %v1733, %v1715
    %v1735 = vadd.f32 %v1734, %v1716
    %v1736 = vadd.f32 %v1735, %v1717
    %v1737 = vadd.f32 %v1736, %v1718
    %v1738 = vadd.f32 %v1737, %v1719
    %v1739 = vadd.f32 %v1738, %v1720
    %v1740 = vadd.f32 %v1739, %v1721
    %1741 = vadd.xlane.f32.xlu0 %v1740
    %v1742 = vpop.xlane.xlu0 %1741
    %v1743 = vadd.f32 %v1722, %v1723
    %v1744 = vadd.f32 %v1743, %v1724
    %v1745 = vadd.f32 %v1744, %v1725
    %v1746 = vadd.f32 %v1745, %v1726
    %v1747 = vadd.f32 %v1746, %v1727
    %v1748 = vadd.f32 %v1747, %v1728
    %v1749 = vadd.f32 %v1748, %v1729
    %v1750 = vadd.f32 %v1749, %v1730
    %v1751 = vadd.f32 %v1750, %v1731
    %1752 = vadd.xlane.f32.xlu0 %v1751
    %v1753 = vpop.xlane.xlu0 %1752
    %v1754 = vadd.f32 %v1742, %v1753
    %v1755 = vrot.slane %v1754, 4
    %v1756 = vadd.f32 %v1754, %v1755
    %v1757 = vrot.slane %v1756, 2
    %v1758 = vadd.f32 %v1756, %v1757
    %v1759 = vrot.slane %v1758, 1
    %v1760 = vadd.f32 %v1758, %v1759
    %v1761 = vmul.f32 %v1760, 5e-05
    %v1762 = vmul.f32 %v1712, %v1712
    %v1763 = vmul.f32 %v1713, %v1713
    %v1764 = vmul.f32 %v1714, %v1714
    %v1765 = vmul.f32 %v1715, %v1715
    %v1766 = vmul.f32 %v1716, %v1716
    %v1767 = vmul.f32 %v1717, %v1717
    %v1768 = vmul.f32 %v1718, %v1718
    %v1769 = vmul.f32 %v1719, %v1719
    %v1770 = vmul.f32 %v1720, %v1720
    %v1771 = vmul.f32 %v1721, %v1721
    %v1772 = vmul.f32 %v1722, %v1722
    %v1773 = vmul.f32 %v1723, %v1723
    %v1774 = vmul.f32 %v1724, %v1724
    %v1775 = vmul.f32 %v1725, %v1725
    %v1776 = vmul.f32 %v1726, %v1726
    %v1777 = vmul.f32 %v1727, %v1727
    %v1778 = vmul.f32 %v1728, %v1728
    %v1779 = vmul.f32 %v1729, %v1729
    %v1780 = vmul.f32 %v1730, %v1730
    %v1781 = vmul.f32 %v1731, %v1731
    %v1782 = vadd.f32 %v1762, %v1763
    %v1783 = vadd.f32 %v1782, %v1764
    %v1784 = vadd.f32 %v1783, %v1765
    %v1785 = vadd.f32 %v1784, %v1766
    %v1786 = vadd.f32 %v1785, %v1767
    %v1787 = vadd.f32 %v1786, %v1768
    %v1788 = vadd.f32 %v1787, %v1769
    %v1789 = vadd.f32 %v1788, %v1770
    %v1790 = vadd.f32 %v1789, %v1771
    %1791 = vadd.xlane.f32.xlu0 %v1790
    %v1792 = vpop.xlane.xlu0 %1791
    %v1793 = vadd.f32 %v1772, %v1773
    %v1794 = vadd.f32 %v1793, %v1774
    %v1795 = vadd.f32 %v1794, %v1775
    %v1796 = vadd.f32 %v1795, %v1776
    %v1797 = vadd.f32 %v1796, %v1777
    %v1798 = vadd.f32 %v1797, %v1778
    %v1799 = vadd.f32 %v1798, %v1779
    %v1800 = vadd.f32 %v1799, %v1780
    %v1801 = vadd.f32 %v1800, %v1781
    %1802 = vadd.xlane.f32.xlu0 %v1801
    %v1803 = vpop.xlane.xlu0 %1802
    %v1804 = vadd.f32 %v1792, %v1803
    %v1805 = vrot.slane %v1804, 4
    %v1806 = vadd.f32 %v1804, %v1805
    %v1807 = vrot.slane %v1806, 2
    %v1808 = vadd.f32 %v1806, %v1807
    %v1809 = vrot.slane %v1808, 1
    %v1810 = vadd.f32 %v1808, %v1809
    %v1811 = vmul.f32 %v1810, 5e-05
    %v1812 = vsub.f32 %v1712, %v1761
    %v1813 = vsub.f32 %v1713, %v1761
    %v1814 = vsub.f32 %v1714, %v1761
    %v1815 = vsub.f32 %v1715, %v1761
    %v1816 = vsub.f32 %v1716, %v1761
    %v1817 = vsub.f32 %v1717, %v1761
    %v1818 = vsub.f32 %v1718, %v1761
    %v1819 = vsub.f32 %v1719, %v1761
    %v1820 = vsub.f32 %v1720, %v1761
    %v1821 = vsub.f32 %v1721, %v1761
    %v1822 = vsub.f32 %v1722, %v1761
    %v1823 = vsub.f32 %v1723, %v1761
    %v1824 = vsub.f32 %v1724, %v1761
    %v1825 = vsub.f32 %v1725, %v1761
    %v1826 = vsub.f32 %v1726, %v1761
    %v1827 = vsub.f32 %v1727, %v1761
    %v1828 = vsub.f32 %v1728, %v1761
    %v1829 = vsub.f32 %v1729, %v1761
    %v1830 = vsub.f32 %v1730, %v1761
    %v1831 = vsub.f32 %v1731, %v1761
    %v1832 = vmul.f32 %v1761, %v1761
    %v1833 = vsub.f32 %v1811, %v1832
    %v1834 = vadd.f32 %v1833, 1e-05
    %v1835 = vrsqrt.pop %v1834
    %v1836 = vmul.f32 %v1835, %v1834
    %v1837 = vmul.f32 %v1836, %v1835
    %v1838 = vmul.f32 0.5, %v1837
    %v1839 = vsub.f32 1.5, %v1838
    %v1840 = vmul.f32 %v1835, %v1839
    %vm1841 = vweird.f32 %v1834
    %vm1842 = vweird.f32 %v1835
    %vm1843 = vmor %vm1841, %vm1842
    %v1844 = vsel %vm1843, %v1835, %v1840
    %v1845 = vmul.f32 %v1812, %v1844
    %v1846 = vmul.f32 %v1813, %v1844
    %v1847 = vmul.f32 %v1814, %v1844
    %v1848 = vmul.f32 %v1815, %v1844
    %v1849 = vmul.f32 %v1816, %v1844
    %v1850 = vmul.f32 %v1817, %v1844
    %v1851 = vmul.f32 %v1818, %v1844
    %v1852 = vmul.f32 %v1819, %v1844
    %v1853 = vmul.f32 %v1820, %v1844
    %v1854 = vmul.f32 %v1821, %v1844
    %v1855 = vmul.f32 %v1822, %v1844
    %v1856 = vmul.f32 %v1823, %v1844
    %v1857 = vmul.f32 %v1824, %v1844
    %v1858 = vmul.f32 %v1825, %v1844
    %v1859 = vmul.f32 %v1826, %v1844
    %v1860 = vmul.f32 %v1827, %v1844
    %v1861 = vmul.f32 %v1828, %v1844
    %v1862 = vmul.f32 %v1829, %v1844
    %v1863 = vmul.f32 %v1830, %v1844
    %v1864 = vmul.f32 %v1831, %v1844
    %v1865 = vmul.f32 %v1845, 0.5
    %v1866 = vmul.f32 %v1846, 0.5
    %v1867 = vmul.f32 %v1847, 0.5
    %v1868 = vmul.f32 %v1848, 0.5
    %v1869 = vmul.f32 %v1849, 0.5
    %v1870 = vmul.f32 %v1850, 0.5
    %v1871 = vmul.f32 %v1851, 0.5
    %v1872 = vmul.f32 %v1852, 0.5
    %v1873 = vmul.f32 %v1853, 0.5
    %v1874 = vmul.f32 %v1854, 0.5
    %v1875 = vmul.f32 %v1855, 0.5
    %v1876 = vmul.f32 %v1856, 0.5
    %v1877 = vmul.f32 %v1857, 0.5
    %v1878 = vmul.f32 %v1858, 0.5
    %v1879 = vmul.f32 %v1859, 0.5
    %v1880 = vmul.f32 %v1860, 0.5
    %v1881 = vmul.f32 %v1861, 0.5
    %v1882 = vmul.f32 %v1862, 0.5
    %v1883 = vmul.f32 %v1863, 0.5
    %v1884 = vmul.f32 %v1864, 0.5
    %v1885 = vtanh.pop %v1865
    %v1886 = vtanh.pop %v1866
    %v1887 = vtanh.pop %v1867
    %v1888 = vtanh.pop %v1868
    %v1889 = vtanh.pop %v1869
    %v1890 = vtanh.pop %v1870
    %v1891 = vtanh.pop %v1871
    %v1892 = vtanh.pop %v1872
    %v1893 = vtanh.pop %v1873
    %v1894 = vtanh.pop %v1874
    %v1895 = vtanh.pop %v1875
    %v1896 = vtanh.pop %v1876
    %v1897 = vtanh.pop %v1877
    %v1898 = vtanh.pop %v1878
    %v1899 = vtanh.pop %v1879
    %v1900 = vtanh.pop %v1880
    %v1901 = vtanh.pop %v1881
    %v1902 = vtanh.pop %v1882
    %v1903 = vtanh.pop %v1883
    %v1904 = vtanh.pop %v1884
    %v1905 = vmul.f32 %v1885, 0.5
    %v1906 = vmul.f32 %v1886, 0.5
    %v1907 = vmul.f32 %v1887, 0.5
    %v1908 = vmul.f32 %v1888, 0.5
    %v1909 = vmul.f32 %v1889, 0.5
    %v1910 = vmul.f32 %v1890, 0.5
    %v1911 = vmul.f32 %v1891, 0.5
    %v1912 = vmul.f32 %v1892, 0.5
    %v1913 = vmul.f32 %v1893, 0.5
    %v1914 = vmul.f32 %v1894, 0.5
    %v1915 = vmul.f32 %v1895, 0.5
    %v1916 = vmul.f32 %v1896, 0.5
    %v1917 = vmul.f32 %v1897, 0.5
    %v1918 = vmul.f32 %v1898, 0.5
    %v1919 = vmul.f32 %v1899, 0.5
    %v1920 = vmul.f32 %v1900, 0.5
    %v1921 = vmul.f32 %v1901, 0.5
    %v1922 = vmul.f32 %v1902, 0.5
    %v1923 = vmul.f32 %v1903, 0.5
    %v1924 = vmul.f32 %v1904, 0.5
    %v1925 = vadd.f32 %v1905, 0.5
    %v1926 = vadd.f32 %v1906, 0.5
    %v1927 = vadd.f32 %v1907, 0.5
    %v1928 = vadd.f32 %v1908, 0.5
    %v1929 = vadd.f32 %v1909, 0.5
    %v1930 = vadd.f32 %v1910, 0.5
    %v1931 = vadd.f32 %v1911, 0.5
    %v1932 = vadd.f32 %v1912, 0.5
    %v1933 = vadd.f32 %v1913, 0.5
    %v1934 = vadd.f32 %v1914, 0.5
    %v1935 = vadd.f32 %v1915, 0.5
    %v1936 = vadd.f32 %v1916, 0.5
    %v1937 = vadd.f32 %v1917, 0.5
    %v1938 = vadd.f32 %v1918, 0.5
    %v1939 = vadd.f32 %v1919, 0.5
    %v1940 = vadd.f32 %v1920, 0.5
    %v1941 = vadd.f32 %v1921, 0.5
    %v1942 = vadd.f32 %v1922, 0.5
    %v1943 = vadd.f32 %v1923, 0.5
    %v1944 = vadd.f32 %v1924, 0.5
    %1945 = vst [vmem:[%s5] sm:$0xff] %v1925
    %1946 = vst [vmem:[%s5 + $0x8] sm:$0xff] %v1926
    %1947 = vst [vmem:[%s5 + $0x10] sm:$0xff] %v1927
    %1948 = vst [vmem:[%s5 + $0x18] sm:$0xff] %v1928
    %1949 = vst [vmem:[%s5 + $0x20] sm:$0xff] %v1929
    %1950 = vst [vmem:[%s5 + $0x28] sm:$0xff] %v1930
    %1951 = vst [vmem:[%s5 + $0x30] sm:$0xff] %v1931
    %1952 = vst [vmem:[%s5 + $0x38] sm:$0xff] %v1932
    %1953 = vst [vmem:[%s5 + $0x40] sm:$0xff] %v1933
    %1954 = vst [vmem:[%s5 + $0x48] sm:$0xff] %v1934
    %1955 = vst [vmem:[%s5 + $0x50] sm:$0xff] %v1935
    %1956 = vst [vmem:[%s5 + $0x58] sm:$0xff] %v1936
    %1957 = vst [vmem:[%s5 + $0x60] sm:$0xff] %v1937
    %1958 = vst [vmem:[%s5 + $0x68] sm:$0xff] %v1938
    %1959 = vst [vmem:[%s5 + $0x70] sm:$0xff] %v1939
    %1960 = vst [vmem:[%s5 + $0x78] sm:$0xff] %v1940
    %1961 = vst [vmem:[%s5 + $0x80] sm:$0xff] %v1941
    %1962 = vst [vmem:[%s5 + $0x88] sm:$0xff] %v1942
    %1963 = vst [vmem:[%s5 + $0x90] sm:$0xff] %v1943
    %1964 = vst [vmem:[%s5 + $0x98] sm:$0xff] %v1944
    %v1965 = vld [vmem:[#allocation3 + $0xa0] sm:$0xff]
    %v1966 = vld [vmem:[#allocation3 + $0xa8] sm:$0xff]
    %v1967 = vld [vmem:[#allocation3 + $0xb0] sm:$0xff]
    %v1968 = vld [vmem:[#allocation3 + $0xb8] sm:$0xff]
    %v1969 = vld [vmem:[#allocation3 + $0xc0] sm:$0xff]
    %v1970 = vld [vmem:[#allocation3 + $0xc8] sm:$0xff]
    %v1971 = vld [vmem:[#allocation3 + $0xd0] sm:$0xff]
    %v1972 = vld [vmem:[#allocation3 + $0xd8] sm:$0xff]
    %v1973 = vld [vmem:[#allocation3 + $0xe0] sm:$0xff]
    %v1974 = vld [vmem:[#allocation3 + $0xe8] sm:$0xff]
    %v1975 = vld [vmem:[#allocation3 + $0xf0] sm:$0xff]
    %v1976 = vld [vmem:[#allocation3 + $0xf8] sm:$0xff]
    %v1977 = vld [vmem:[#allocation3 + $0x100] sm:$0xff]
    %v1978 = vld [vmem:[#allocation3 + $0x108] sm:$0xff]
    %v1979 = vld [vmem:[#allocation3 + $0x110] sm:$0xff]
    %v1980 = vld [vmem:[#allocation3 + $0x118] sm:$0xff]
    %v1981 = vld [vmem:[#allocation3 + $0x120] sm:$0xff]
    %v1982 = vld [vmem:[#allocation3 + $0x128] sm:$0xff]
    %v1983 = vld [vmem:[#allocation3 + $0x130] sm:$0xff]
    %v1984 = vld [vmem:[#allocation3 + $0x138] sm:$0xff]
    %v1985 = vadd.f32 %v1965, %v1966
    %v1986 = vadd.f32 %v1985, %v1967
    %v1987 = vadd.f32 %v1986, %v1968
    %v1988 = vadd.f32 %v1987, %v1969
    %v1989 = vadd.f32 %v1988, %v1970
    %v1990 = vadd.f32 %v1989, %v1971
    %v1991 = vadd.f32 %v1990, %v1972
    %v1992 = vadd.f32 %v1991, %v1973
    %v1993 = vadd.f32 %v1992, %v1974
    %1994 = vadd.xlane.f32.xlu0 %v1993
    %v1995 = vpop.xlane.xlu0 %1994
    %v1996 = vadd.f32 %v1975, %v1976
    %v1997 = vadd.f32 %v1996, %v1977
    %v1998 = vadd.f32 %v1997, %v1978
    %v1999 = vadd.f32 %v1998, %v1979
    %v2000 = vadd.f32 %v1999, %v1980
    %v2001 = vadd.f32 %v2000, %v1981
    %v2002 = vadd.f32 %v2001, %v1982
    %v2003 = vadd.f32 %v2002, %v1983
    %v2004 = vadd.f32 %v2003, %v1984
    %2005 = vadd.xlane.f32.xlu0 %v2004
    %v2006 = vpop.xlane.xlu0 %2005
    %v2007 = vadd.f32 %v1995, %v2006
    %v2008 = vrot.slane %v2007, 4
    %v2009 = vadd.f32 %v2007, %v2008
    %v2010 = vrot.slane %v2009, 2
    %v2011 = vadd.f32 %v2009, %v2010
    %v2012 = vrot.slane %v2011, 1
    %v2013 = vadd.f32 %v2011, %v2012
    %v2014 = vmul.f32 %v2013, 5e-05
    %v2015 = vmul.f32 %v1965, %v1965
    %v2016 = vmul.f32 %v1966, %v1966
    %v2017 = vmul.f32 %v1967, %v1967
    %v2018 = vmul.f32 %v1968, %v1968
    %v2019 = vmul.f32 %v1969, %v1969
    %v2020 = vmul.f32 %v1970, %v1970
    %v2021 = vmul.f32 %v1971, %v1971
    %v2022 = vmul.f32 %v1972, %v1972
    %v2023 = vmul.f32 %v1973, %v1973
    %v2024 = vmul.f32 %v1974, %v1974
    %v2025 = vmul.f32 %v1975, %v1975
    %v2026 = vmul.f32 %v1976, %v1976
    %v2027 = vmul.f32 %v1977, %v1977
    %v2028 = vmul.f32 %v1978, %v1978
    %v2029 = vmul.f32 %v1979, %v1979
    %v2030 = vmul.f32 %v1980, %v1980
    %v2031 = vmul.f32 %v1981, %v1981
    %v2032 = vmul.f32 %v1982, %v1982
    %v2033 = vmul.f32 %v1983, %v1983
    %v2034 = vmul.f32 %v1984, %v1984
    %v2035 = vadd.f32 %v2015, %v2016
    %v2036 = vadd.f32 %v2035, %v2017
    %v2037 = vadd.f32 %v2036, %v2018
    %v2038 = vadd.f32 %v2037, %v2019
    %v2039 = vadd.f32 %v2038, %v2020
    %v2040 = vadd.f32 %v2039, %v2021
    %v2041 = vadd.f32 %v2040, %v2022
    %v2042 = vadd.f32 %v2041, %v2023
    %v2043 = vadd.f32 %v2042, %v2024
    %2044 = vadd.xlane.f32.xlu0 %v2043
    %v2045 = vpop.xlane.xlu0 %2044
    %v2046 = vadd.f32 %v2025, %v2026
    %v2047 = vadd.f32 %v2046, %v2027
    %v2048 = vadd.f32 %v2047, %v2028
    %v2049 = vadd.f32 %v2048, %v2029
    %v2050 = vadd.f32 %v2049, %v2030
    %v2051 = vadd.f32 %v2050, %v2031
    %v2052 = vadd.f32 %v2051, %v2032
    %v2053 = vadd.f32 %v2052, %v2033
    %v2054 = vadd.f32 %v2053, %v2034
    %2055 = vadd.xlane.f32.xlu0 %v2054
    %v2056 = vpop.xlane.xlu0 %2055
    %v2057 = vadd.f32 %v2045, %v2056
    %v2058 = vrot.slane %v2057, 4
    %v2059 = vadd.f32 %v2057, %v2058
    %v2060 = vrot.slane %v2059, 2
    %v2061 = vadd.f32 %v2059, %v2060
    %v2062 = vrot.slane %v2061, 1
    %v2063 = vadd.f32 %v2061, %v2062
    %v2064 = vmul.f32 %v2063, 5e-05
    %v2065 = vsub.f32 %v1965, %v2014
    %v2066 = vsub.f32 %v1966, %v2014
    %v2067 = vsub.f32 %v1967, %v2014
    %v2068 = vsub.f32 %v1968, %v2014
    %v2069 = vsub.f32 %v1969, %v2014
    %v2070 = vsub.f32 %v1970, %v2014
    %v2071 = vsub.f32 %v1971, %v2014
    %v2072 = vsub.f32 %v1972, %v2014
    %v2073 = vsub.f32 %v1973, %v2014
    %v2074 = vsub.f32 %v1974, %v2014
    %v2075 = vsub.f32 %v1975, %v2014
    %v2076 = vsub.f32 %v1976, %v2014
    %v2077 = vsub.f32 %v1977, %v2014
    %v2078 = vsub.f32 %v1978, %v2014
    %v2079 = vsub.f32 %v1979, %v2014
    %v2080 = vsub.f32 %v1980, %v2014
    %v2081 = vsub.f32 %v1981, %v2014
    %v2082 = vsub.f32 %v1982, %v2014
    %v2083 = vsub.f32 %v1983, %v2014
    %v2084 = vsub.f32 %v1984, %v2014
    %v2085 = vmul.f32 %v2014, %v2014
    %v2086 = vsub.f32 %v2064, %v2085
    %v2087 = vadd.f32 %v2086, 1e-05
    %v2088 = vrsqrt.pop %v2087
    %v2089 = vmul.f32 %v2088, %v2087
    %v2090 = vmul.f32 %v2089, %v2088
    %v2091 = vmul.f32 0.5, %v2090
    %v2092 = vsub.f32 1.5, %v2091
    %v2093 = vmul.f32 %v2088, %v2092
    %vm2094 = vweird.f32 %v2087
    %vm2095 = vweird.f32 %v2088
    %vm2096 = vmor %vm2094, %vm2095
    %v2097 = vsel %vm2096, %v2088, %v2093
    %v2098 = vmul.f32 %v2065, %v2097
    %v2099 = vmul.f32 %v2066, %v2097
    %v2100 = vmul.f32 %v2067, %v2097
    %v2101 = vmul.f32 %v2068, %v2097
    %v2102 = vmul.f32 %v2069, %v2097
    %v2103 = vmul.f32 %v2070, %v2097
    %v2104 = vmul.f32 %v2071, %v2097
    %v2105 = vmul.f32 %v2072, %v2097
    %v2106 = vmul.f32 %v2073, %v2097
    %v2107 = vmul.f32 %v2074, %v2097
    %v2108 = vmul.f32 %v2075, %v2097
    %v2109 = vmul.f32 %v2076, %v2097
    %v2110 = vmul.f32 %v2077, %v2097
    %v2111 = vmul.f32 %v2078, %v2097
    %v2112 = vmul.f32 %v2079, %v2097
    %v2113 = vmul.f32 %v2080, %v2097
    %v2114 = vmul.f32 %v2081, %v2097
    %v2115 = vmul.f32 %v2082, %v2097
    %v2116 = vmul.f32 %v2083, %v2097
    %v2117 = vmul.f32 %v2084, %v2097
    %v2118 = vmul.f32 %v2098, 0.5
    %v2119 = vmul.f32 %v2099, 0.5
    %v2120 = vmul.f32 %v2100, 0.5
    %v2121 = vmul.f32 %v2101, 0.5
    %v2122 = vmul.f32 %v2102, 0.5
    %v2123 = vmul.f32 %v2103, 0.5
    %v2124 = vmul.f32 %v2104, 0.5
    %v2125 = vmul.f32 %v2105, 0.5
    %v2126 = vmul.f32 %v2106, 0.5
    %v2127 = vmul.f32 %v2107, 0.5
    %v2128 = vmul.f32 %v2108, 0.5
    %v2129 = vmul.f32 %v2109, 0.5
    %v2130 = vmul.f32 %v2110, 0.5
    %v2131 = vmul.f32 %v2111, 0.5
    %v2132 = vmul.f32 %v2112, 0.5
    %v2133 = vmul.f32 %v2113, 0.5
    %v2134 = vmul.f32 %v2114, 0.5
    %v2135 = vmul.f32 %v2115, 0.5
    %v2136 = vmul.f32 %v2116, 0.5
    %v2137 = vmul.f32 %v2117, 0.5
    %v2138 = vtanh.pop %v2118
    %v2139 = vtanh.pop %v2119
    %v2140 = vtanh.pop %v2120
    %v2141 = vtanh.pop %v2121
    %v2142 = vtanh.pop %v2122
    %v2143 = vtanh.pop %v2123
    %v2144 = vtanh.pop %v2124
    %v2145 = vtanh.pop %v2125
    %v2146 = vtanh.pop %v2126
    %v2147 = vtanh.pop %v2127
    %v2148 = vtanh.pop %v2128
    %v2149 = vtanh.pop %v2129
    %v2150 = vtanh.pop %v2130
    %v2151 = vtanh.pop %v2131
    %v2152 = vtanh.pop %v2132
    %v2153 = vtanh.pop %v2133
    %v2154 = vtanh.pop %v2134
    %v2155 = vtanh.pop %v2135
    %v2156 = vtanh.pop %v2136
    %v2157 = vtanh.pop %v2137
    %v2158 = vmul.f32 %v2138, 0.5
    %v2159 = vmul.f32 %v2139, 0.5
    %v2160 = vmul.f32 %v2140, 0.5
    %v2161 = vmul.f32 %v2141, 0.5
    %v2162 = vmul.f32 %v2142, 0.5
    %v2163 = vmul.f32 %v2143, 0.5
    %v2164 = vmul.f32 %v2144, 0.5
    %v2165 = vmul.f32 %v2145, 0.5
    %v2166 = vmul.f32 %v2146, 0.5
    %v2167 = vmul.f32 %v2147, 0.5
    %v2168 = vmul.f32 %v2148, 0.5
    %v2169 = vmul.f32 %v2149, 0.5
    %v2170 = vmul.f32 %v2150, 0.5
    %v2171 = vmul.f32 %v2151, 0.5
    %v2172 = vmul.f32 %v2152, 0.5
    %v2173 = vmul.f32 %v2153, 0.5
    %v2174 = vmul.f32 %v2154, 0.5
    %v2175 = vmul.f32 %v2155, 0.5
    %v2176 = vmul.f32 %v2156, 0.5
    %v2177 = vmul.f32 %v2157, 0.5
    %v2178 = vadd.f32 %v2158, 0.5
    %v2179 = vadd.f32 %v2159, 0.5
    %v2180 = vadd.f32 %v2160, 0.5
    %v2181 = vadd.f32 %v2161, 0.5
    %v2182 = vadd.f32 %v2162, 0.5
    %v2183 = vadd.f32 %v2163, 0.5
    %v2184 = vadd.f32 %v2164, 0.5
    %v2185 = vadd.f32 %v2165, 0.5
    %v2186 = vadd.f32 %v2166, 0.5
    %v2187 = vadd.f32 %v2167, 0.5
    %v2188 = vadd.f32 %v2168, 0.5
    %v2189 = vadd.f32 %v2169, 0.5
    %v2190 = vadd.f32 %v2170, 0.5
    %v2191 = vadd.f32 %v2171, 0.5
    %v2192 = vadd.f32 %v2172, 0.5
    %v2193 = vadd.f32 %v2173, 0.5
    %v2194 = vadd.f32 %v2174, 0.5
    %v2195 = vadd.f32 %v2175, 0.5
    %v2196 = vadd.f32 %v2176, 0.5
    %v2197 = vadd.f32 %v2177, 0.5
    %2198 = vst [vmem:[%s5 + $0xa0] sm:$0xff] %v2178
    %2199 = vst [vmem:[%s5 + $0xa8] sm:$0xff] %v2179
    %2200 = vst [vmem:[%s5 + $0xb0] sm:$0xff] %v2180
    %2201 = vst [vmem:[%s5 + $0xb8] sm:$0xff] %v2181
    %2202 = vst [vmem:[%s5 + $0xc0] sm:$0xff] %v2182
    %2203 = vst [vmem:[%s5 + $0xc8] sm:$0xff] %v2183
    %2204 = vst [vmem:[%s5 + $0xd0] sm:$0xff] %v2184
    %2205 = vst [vmem:[%s5 + $0xd8] sm:$0xff] %v2185
    %2206 = vst [vmem:[%s5 + $0xe0] sm:$0xff] %v2186
    %2207 = vst [vmem:[%s5 + $0xe8] sm:$0xff] %v2187
    %2208 = vst [vmem:[%s5 + $0xf0] sm:$0xff] %v2188
    %2209 = vst [vmem:[%s5 + $0xf8] sm:$0xff] %v2189
    %2210 = vst [vmem:[%s5 + $0x100] sm:$0xff] %v2190
    %2211 = vst [vmem:[%s5 + $0x108] sm:$0xff] %v2191
    %2212 = vst [vmem:[%s5 + $0x110] sm:$0xff] %v2192
    %2213 = vst [vmem:[%s5 + $0x118] sm:$0xff] %v2193
    %2214 = vst [vmem:[%s5 + $0x120] sm:$0xff] %v2194
    %2215 = vst [vmem:[%s5 + $0x128] sm:$0xff] %v2195
    %2216 = vst [vmem:[%s5 + $0x130] sm:$0xff] %v2196
    %2217 = vst [vmem:[%s5 + $0x138] sm:$0xff] %v2197
    %v2218 = vld [vmem:[#allocation3 + $0x140] sm:$0xff]
    %v2219 = vld [vmem:[#allocation3 + $0x148] sm:$0xff]
    %v2220 = vld [vmem:[#allocation3 + $0x150] sm:$0xff]
    %v2221 = vld [vmem:[#allocation3 + $0x158] sm:$0xff]
    %v2222 = vld [vmem:[#allocation3 + $0x160] sm:$0xff]
    %v2223 = vld [vmem:[#allocation3 + $0x168] sm:$0xff]
    %v2224 = vld [vmem:[#allocation3 + $0x170] sm:$0xff]
    %v2225 = vld [vmem:[#allocation3 + $0x178] sm:$0xff]
    %v2226 = vld [vmem:[#allocation3 + $0x180] sm:$0xff]
    %v2227 = vld [vmem:[#allocation3 + $0x188] sm:$0xff]
    %v2228 = vld [vmem:[#allocation3 + $0x190] sm:$0xff]
    %v2229 = vld [vmem:[#allocation3 + $0x198] sm:$0xff]
    %v2230 = vld [vmem:[#allocation3 + $0x1a0] sm:$0xff]
    %v2231 = vld [vmem:[#allocation3 + $0x1a8] sm:$0xff]
    %v2232 = vld [vmem:[#allocation3 + $0x1b0] sm:$0xff]
    %v2233 = vld [vmem:[#allocation3 + $0x1b8] sm:$0xff]
    %v2234 = vld [vmem:[#allocation3 + $0x1c0] sm:$0xff]
    %v2235 = vld [vmem:[#allocation3 + $0x1c8] sm:$0xff]
    %v2236 = vld [vmem:[#allocation3 + $0x1d0] sm:$0xff]
    %v2237 = vld [vmem:[#allocation3 + $0x1d8] sm:$0xff]
    %v2238 = vadd.f32 %v2218, %v2219
    %v2239 = vadd.f32 %v2238, %v2220
    %v2240 = vadd.f32 %v2239, %v2221
    %v2241 = vadd.f32 %v2240, %v2222
    %v2242 = vadd.f32 %v2241, %v2223
    %v2243 = vadd.f32 %v2242, %v2224
    %v2244 = vadd.f32 %v2243, %v2225
    %v2245 = vadd.f32 %v2244, %v2226
    %v2246 = vadd.f32 %v2245, %v2227
    %2247 = vadd.xlane.f32.xlu0 %v2246
    %v2248 = vpop.xlane.xlu0 %2247
    %v2249 = vadd.f32 %v2228, %v2229
    %v2250 = vadd.f32 %v2249, %v2230
    %v2251 = vadd.f32 %v2250, %v2231
    %v2252 = vadd.f32 %v2251, %v2232
    %v2253 = vadd.f32 %v2252, %v2233
    %v2254 = vadd.f32 %v2253, %v2234
    %v2255 = vadd.f32 %v2254, %v2235
    %v2256 = vadd.f32 %v2255, %v2236
    %v2257 = vadd.f32 %v2256, %v2237
    %2258 = vadd.xlane.f32.xlu0 %v2257
    %v2259 = vpop.xlane.xlu0 %2258
    %v2260 = vadd.f32 %v2248, %v2259
    %v2261 = vrot.slane %v2260, 4
    %v2262 = vadd.f32 %v2260, %v2261
    %v2263 = vrot.slane %v2262, 2
    %v2264 = vadd.f32 %v2262, %v2263
    %v2265 = vrot.slane %v2264, 1
    %v2266 = vadd.f32 %v2264, %v2265
    %v2267 = vmul.f32 %v2266, 5e-05
    %v2268 = vmul.f32 %v2218, %v2218
    %v2269 = vmul.f32 %v2219, %v2219
    %v2270 = vmul.f32 %v2220, %v2220
    %v2271 = vmul.f32 %v2221, %v2221
    %v2272 = vmul.f32 %v2222, %v2222
    %v2273 = vmul.f32 %v2223, %v2223
    %v2274 = vmul.f32 %v2224, %v2224
    %v2275 = vmul.f32 %v2225, %v2225
    %v2276 = vmul.f32 %v2226, %v2226
    %v2277 = vmul.f32 %v2227, %v2227
    %v2278 = vmul.f32 %v2228, %v2228
    %v2279 = vmul.f32 %v2229, %v2229
    %v2280 = vmul.f32 %v2230, %v2230
    %v2281 = vmul.f32 %v2231, %v2231
    %v2282 = vmul.f32 %v2232, %v2232
    %v2283 = vmul.f32 %v2233, %v2233
    %v2284 = vmul.f32 %v2234, %v2234
    %v2285 = vmul.f32 %v2235, %v2235
    %v2286 = vmul.f32 %v2236, %v2236
    %v2287 = vmul.f32 %v2237, %v2237
    %v2288 = vadd.f32 %v2268, %v2269
    %v2289 = vadd.f32 %v2288, %v2270
    %v2290 = vadd.f32 %v2289, %v2271
    %v2291 = vadd.f32 %v2290, %v2272
    %v2292 = vadd.f32 %v2291, %v2273
    %v2293 = vadd.f32 %v2292, %v2274
    %v2294 = vadd.f32 %v2293, %v2275
    %v2295 = vadd.f32 %v2294, %v2276
    %v2296 = vadd.f32 %v2295, %v2277
    %2297 = vadd.xlane.f32.xlu0 %v2296
    %v2298 = vpop.xlane.xlu0 %2297
    %v2299 = vadd.f32 %v2278, %v2279
    %v2300 = vadd.f32 %v2299, %v2280
    %v2301 = vadd.f32 %v2300, %v2281
    %v2302 = vadd.f32 %v2301, %v2282
    %v2303 = vadd.f32 %v2302, %v2283
    %v2304 = vadd.f32 %v2303, %v2284
    %v2305 = vadd.f32 %v2304, %v2285
    %v2306 = vadd.f32 %v2305, %v2286
    %v2307 = vadd.f32 %v2306, %v2287
    %2308 = vadd.xlane.f32.xlu0 %v2307
    %v2309 = vpop.xlane.xlu0 %2308
    %v2310 = vadd.f32 %v2298, %v2309
    %v2311 = vrot.slane %v2310, 4
    %v2312 = vadd.f32 %v2310, %v2311
    %v2313 = vrot.slane %v2312, 2
    %v2314 = vadd.f32 %v2312, %v2313
    %v2315 = vrot.slane %v2314, 1
    %v2316 = vadd.f32 %v2314, %v2315
    %v2317 = vmul.f32 %v2316, 5e-05
    %v2318 = vsub.f32 %v2218, %v2267
    %v2319 = vsub.f32 %v2219, %v2267
    %v2320 = vsub.f32 %v2220, %v2267
    %v2321 = vsub.f32 %v2221, %v2267
    %v2322 = vsub.f32 %v2222, %v2267
    %v2323 = vsub.f32 %v2223, %v2267
    %v2324 = vsub.f32 %v2224, %v2267
    %v2325 = vsub.f32 %v2225, %v2267
    %v2326 = vsub.f32 %v2226, %v2267
    %v2327 = vsub.f32 %v2227, %v2267
    %v2328 = vsub.f32 %v2228, %v2267
    %v2329 = vsub.f32 %v2229, %v2267
    %v2330 = vsub.f32 %v2230, %v2267
    %v2331 = vsub.f32 %v2231, %v2267
    %v2332 = vsub.f32 %v2232, %v2267
    %v2333 = vsub.f32 %v2233, %v2267
    %v2334 = vsub.f32 %v2234, %v2267
    %v2335 = vsub.f32 %v2235, %v2267
    %v2336 = vsub.f32 %v2236, %v2267
    %v2337 = vsub.f32 %v2237, %v2267
    %v2338 = vmul.f32 %v2267, %v2267
    %v2339 = vsub.f32 %v2317, %v2338
    %v2340 = vadd.f32 %v2339, 1e-05
    %v2341 = vrsqrt.pop %v2340
    %v2342 = vmul.f32 %v2341, %v2340
    %v2343 = vmul.f32 %v2342, %v2341
    %v2344 = vmul.f32 0.5, %v2343
    %v2345 = vsub.f32 1.5, %v2344
    %v2346 = vmul.f32 %v2341, %v2345
    %vm2347 = vweird.f32 %v2340
    %vm2348 = vweird.f32 %v2341
    %vm2349 = vmor %vm2347, %vm2348
    %v2350 = vsel %vm2349, %v2341, %v2346
    %v2351 = vmul.f32 %v2318, %v2350
    %v2352 = vmul.f32 %v2319, %v2350
    %v2353 = vmul.f32 %v2320, %v2350
    %v2354 = vmul.f32 %v2321, %v2350
    %v2355 = vmul.f32 %v2322, %v2350
    %v2356 = vmul.f32 %v2323, %v2350
    %v2357 = vmul.f32 %v2324, %v2350
    %v2358 = vmul.f32 %v2325, %v2350
    %v2359 = vmul.f32 %v2326, %v2350
    %v2360 = vmul.f32 %v2327, %v2350
    %v2361 = vmul.f32 %v2328, %v2350
    %v2362 = vmul.f32 %v2329, %v2350
    %v2363 = vmul.f32 %v2330, %v2350
    %v2364 = vmul.f32 %v2331, %v2350
    %v2365 = vmul.f32 %v2332, %v2350
    %v2366 = vmul.f32 %v2333, %v2350
    %v2367 = vmul.f32 %v2334, %v2350
    %v2368 = vmul.f32 %v2335, %v2350
    %v2369 = vmul.f32 %v2336, %v2350
    %v2370 = vmul.f32 %v2337, %v2350
    %v2371 = vmul.f32 %v2351, 0.5
    %v2372 = vmul.f32 %v2352, 0.5
    %v2373 = vmul.f32 %v2353, 0.5
    %v2374 = vmul.f32 %v2354, 0.5
    %v2375 = vmul.f32 %v2355, 0.5
    %v2376 = vmul.f32 %v2356, 0.5
    %v2377 = vmul.f32 %v2357, 0.5
    %v2378 = vmul.f32 %v2358, 0.5
    %v2379 = vmul.f32 %v2359, 0.5
    %v2380 = vmul.f32 %v2360, 0.5
    %v2381 = vmul.f32 %v2361, 0.5
    %v2382 = vmul.f32 %v2362, 0.5
    %v2383 = vmul.f32 %v2363, 0.5
    %v2384 = vmul.f32 %v2364, 0.5
    %v2385 = vmul.f32 %v2365, 0.5
    %v2386 = vmul.f32 %v2366, 0.5
    %v2387 = vmul.f32 %v2367, 0.5
    %v2388 = vmul.f32 %v2368, 0.5
    %v2389 = vmul.f32 %v2369, 0.5
    %v2390 = vmul.f32 %v2370, 0.5
    %v2391 = vtanh.pop %v2371
    %v2392 = vtanh.pop %v2372
    %v2393 = vtanh.pop %v2373
    %v2394 = vtanh.pop %v2374
    %v2395 = vtanh.pop %v2375
    %v2396 = vtanh.pop %v2376
    %v2397 = vtanh.pop %v2377
    %v2398 = vtanh.pop %v2378
    %v2399 = vtanh.pop %v2379
    %v2400 = vtanh.pop %v2380
    %v2401 = vtanh.pop %v2381
    %v2402 = vtanh.pop %v2382
    %v2403 = vtanh.pop %v2383
    %v2404 = vtanh.pop %v2384
    %v2405 = vtanh.pop %v2385
    %v2406 = vtanh.pop %v2386
    %v2407 = vtanh.pop %v2387
    %v2408 = vtanh.pop %v2388
    %v2409 = vtanh.pop %v2389
    %v2410 = vtanh.pop %v2390
    %v2411 = vmul.f32 %v2391, 0.5
    %v2412 = vmul.f32 %v2392, 0.5
    %v2413 = vmul.f32 %v2393, 0.5
    %v2414 = vmul.f32 %v2394, 0.5
    %v2415 = vmul.f32 %v2395, 0.5
    %v2416 = vmul.f32 %v2396, 0.5
    %v2417 = vmul.f32 %v2397, 0.5
    %v2418 = vmul.f32 %v2398, 0.5
    %v2419 = vmul.f32 %v2399, 0.5
    %v2420 = vmul.f32 %v2400, 0.5
    %v2421 = vmul.f32 %v2401, 0.5
    %v2422 = vmul.f32 %v2402, 0.5
    %v2423 = vmul.f32 %v2403, 0.5
    %v2424 = vmul.f32 %v2404, 0.5
    %v2425 = vmul.f32 %v2405, 0.5
    %v2426 = vmul.f32 %v2406, 0.5
    %v2427 = vmul.f32 %v2407, 0.5
    %v2428 = vmul.f32 %v2408, 0.5
    %v2429 = vmul.f32 %v2409, 0.5
    %v2430 = vmul.f32 %v2410, 0.5
    %v2431 = vadd.f32 %v2411, 0.5
    %v2432 = vadd.f32 %v2412, 0.5
    %v2433 = vadd.f32 %v2413, 0.5
    %v2434 = vadd.f32 %v2414, 0.5
    %v2435 = vadd.f32 %v2415, 0.5
    %v2436 = vadd.f32 %v2416, 0.5
    %v2437 = vadd.f32 %v2417, 0.5
    %v2438 = vadd.f32 %v2418, 0.5
    %v2439 = vadd.f32 %v2419, 0.5
    %v2440 = vadd.f32 %v2420, 0.5
    %v2441 = vadd.f32 %v2421, 0.5
    %v2442 = vadd.f32 %v2422, 0.5
    %v2443 = vadd.f32 %v2423, 0.5
    %v2444 = vadd.f32 %v2424, 0.5
    %v2445 = vadd.f32 %v2425, 0.5
    %v2446 = vadd.f32 %v2426, 0.5
    %v2447 = vadd.f32 %v2427, 0.5
    %v2448 = vadd.f32 %v2428, 0.5
    %v2449 = vadd.f32 %v2429, 0.5
    %v2450 = vadd.f32 %v2430, 0.5
    %2451 = vst [vmem:[%s5 + $0x140] sm:$0xff] %v2431
    %2452 = vst [vmem:[%s5 + $0x148] sm:$0xff] %v2432
    %2453 = vst [vmem:[%s5 + $0x150] sm:$0xff] %v2433
    %2454 = vst [vmem:[%s5 + $0x158] sm:$0xff] %v2434
    %2455 = vst [vmem:[%s5 + $0x160] sm:$0xff] %v2435
    %2456 = vst [vmem:[%s5 + $0x168] sm:$0xff] %v2436
    %2457 = vst [vmem:[%s5 + $0x170] sm:$0xff] %v2437
    %2458 = vst [vmem:[%s5 + $0x178] sm:$0xff] %v2438
    %2459 = vst [vmem:[%s5 + $0x180] sm:$0xff] %v2439
    %2460 = vst [vmem:[%s5 + $0x188] sm:$0xff] %v2440
    %2461 = vst [vmem:[%s5 + $0x190] sm:$0xff] %v2441
    %2462 = vst [vmem:[%s5 + $0x198] sm:$0xff] %v2442
    %2463 = vst [vmem:[%s5 + $0x1a0] sm:$0xff] %v2443
    %2464 = vst [vmem:[%s5 + $0x1a8] sm:$0xff] %v2444
    %2465 = vst [vmem:[%s5 + $0x1b0] sm:$0xff] %v2445
    %2466 = vst [vmem:[%s5 + $0x1b8] sm:$0xff] %v2446
    %2467 = vst [vmem:[%s5 + $0x1c0] sm:$0xff] %v2447
    %2468 = vst [vmem:[%s5 + $0x1c8] sm:$0xff] %v2448
    %2469 = vst [vmem:[%s5 + $0x1d0] sm:$0xff] %v2449
    %2470 = vst [vmem:[%s5 + $0x1d8] sm:$0xff] %v2450
    // Predicated region
    $region22: #{forward.2} parent=1 // pred_check
      _
    $region23: #{forward.2} parent=1 // pred_check_branch
      %2472 = sbr.rel (0) target = $region25
    $region24: #{forward.2} parent=1 // pred_region
      _
    $region25: #{forward.2} parent=1 // pred_fallthru
      _
    // Predicated region
    $region26: #{forward.2} parent=1 // pred_check
      _
    $region27: #{forward.2} parent=1 // pred_check_branch
      %2474 = sbr.rel (0) target = $region29
    $region28: #{forward.2} parent=1 // pred_region
      _
    $region29: #{forward.2} parent=1 // pred_fallthru
      _
    %2475 = vsyncpa [#allocation10], 1

</llo_original>
